<compile_context>
chip_gen: v7x
topology: tpu7x:2x2x1
jax: 0.10.0
libtpu: 0.0.40
codegen_flags: <defaults>
</compile_context>

<pallas_src>
import functools

import numpy as np
import jax
import jax.numpy as jnp
from jax.experimental import pallas as pl
from jax.experimental.pallas import tpu as pltpu


# ---------------------------------------------------------------------------
# Pallas kernel: folded image/text encode + normalize + CLIP similarity tile.
# ---------------------------------------------------------------------------
def clip_loss_kernel(img_ref, w_img_ref, ids_ref, table_ref, scale_ref, out_ref,
                     *, inv_len, vocab_pad):
    # ----- image tower (folded): [tm, C*H*W] @ [C*H*W, D] on the MXU (bf16 in, f32 acc)
    img_feat = jnp.dot(img_ref[...], w_img_ref[...],
                       preferred_element_type=jnp.float32)            # [tm, D] f32

    # ----- text tower (folded): in-kernel gather via one-hot counts, then MXU matmul
    ids = ids_ref[...]                                                 # [tn, L] int32
    tn, L = ids.shape
    iota = jax.lax.broadcasted_iota(jnp.int32, (tn, L, vocab_pad), 2)
    onehot = (ids[:, :, None] == iota).astype(jnp.float32)             # [tn, L, Vp]
    counts = jnp.sum(onehot, axis=1)                                   # [tn, Vp]
    txt_feat = jnp.dot(counts.astype(table_ref.dtype), table_ref[...],
                       preferred_element_type=jnp.float32) * inv_len   # [tn, D] f32

    # ----- L2 normalize (f32); fold logit_scale/100 into the image factor
    #       (matches reference x / x.norm(); zero-norm -> NaN in both, like PyTorch)
    scale01 = scale_ref[0, 0] * 0.01
    img_s = img_feat * (jax.lax.rsqrt(
        jnp.sum(img_feat * img_feat, axis=-1, keepdims=True)) * scale01)
    txt_n = txt_feat * jax.lax.rsqrt(
        jnp.sum(txt_feat * txt_feat, axis=-1, keepdims=True))

    # ----- fused epilogue: out = 1 - (scale/100) * img_n @ txt_n.T
    tm = img_s.shape[0]
    if tm <= 8 and tn <= 8:
        # Tiny tile: VPU broadcast-multiply + lane reduce beats an MXU push/pop for 2x2.
        logits = jnp.sum(img_s[:, None, :] * txt_n[None, :, :], axis=-1)
    else:
        logits = jnp.dot(img_s, txt_n.T, preferred_element_type=jnp.float32)
    out_ref[...] = 1.0 - logits


# ---------------------------------------------------------------------------
# Param folding (one-time, at setup): collapse the linear towers.
# ---------------------------------------------------------------------------
def fold_params(params, image_shape):
    B, C, H, W = image_shape
    p = params['patch']
    Ph, Pw = H // p, W // p
    P = Ph * Pw
    D = params['img_proj'].shape[1]

    # image tower: mean-pool-before-matmul + (w_patch @ img_proj), tiled over patch
    # positions so the kernel consumes the contiguous NCHW image row-major flat.
    w_fold = (params['w_patch'] @ params['img_proj']) / P              # [C*p*p, D]
    w_fold = w_fold.reshape(C, p, p, D)
    w_full = jnp.broadcast_to(w_fold[:, None, :, None, :, :],
                              (C, Ph, p, Pw, p, D)).reshape(C * H * W, D)

    # text tower: tok_embed @ txt_proj, vocab zero-padded to a lane multiple (>=128).
    table = params['tok_embed'] @ params['txt_proj']                   # [V, D]
    V = table.shape[0]
    V_pad = max(128, ((V + 127) // 128) * 128)
    table = jnp.pad(table, ((0, V_pad - V), (0, 0)))

    return {
        'w_img': w_full.astype(jnp.bfloat16),        # bf16 MXU operand
        'txt_table': table.astype(jnp.bfloat16),     # bf16 MXU operand
        'logit_scale': params['logit_scale'].astype(jnp.float32),   # [1, 1]
    }


# ---------------------------------------------------------------------------
# Wrapper
# ---------------------------------------------------------------------------
def clip_loss(image, text_ids, folded, *, tile_m=None, tile_n=None):
    """image: [B, C, H, W] f32 (NCHW); text_ids: [B, L] int32."""
    B = image.shape[0]
    K_img = int(np.prod(image.shape[1:]))            # C*H*W (3072 here, 256-aligned)
    L = text_ids.shape[1]
    w_img = folded['w_img']                          # [K_img, D] bf16
    table = folded['txt_table']                      # [V_pad, D] bf16
    scale = folded['logit_scale']                    # [1, 1] f32
    V_pad, D = table.shape

    # Contiguous row-major flatten: no patchify transpose, no extra HBM round trip.
    img_flat = image.reshape(B, K_img).astype(jnp.bfloat16)

    # Logits tiling (grid=(1,1) at toy B; tile_m mult of 8 / tile_n mult of 128 at real B).
    tm = tile_m or B
    tn = tile_n or B
    assert B % tm == 0 and B % tn == 0
    grid = (B // tm, B // tn)

    kernel = functools.partial(clip_loss_kernel, inv_len=1.0 / L, vocab_pad=V_pad)

    out = pl.pallas_call(
        kernel,
        out_shape=jax.ShapeDtypeStruct((B, B), jnp.float32),
        grid=grid,
        in_specs=[
            pl.BlockSpec((tm, K_img), lambda i, j: (i, 0)),     # image rows for tile i
            pl.BlockSpec((K_img, D), lambda i, j: (0, 0)),      # folded image weight
            pl.BlockSpec((tn, L), lambda i, j: (j, 0)),         # token ids for tile j
            pl.BlockSpec((V_pad, D), lambda i, j: (0, 0)),      # folded text table
            pl.BlockSpec(memory_space=pltpu.MemorySpace.SMEM),  # logit_scale scalar
        ],
        out_specs=pl.BlockSpec((tm, tn), lambda i, j: (i, j)),
        compiler_params=pltpu.CompilerParams(
            dimension_semantics=("parallel", "parallel")),
    )(img_flat, w_img, text_ids, table, scale)
    return out


# ---------------------------------------------------------------------------
# Pure-JAX reference (unfused, f32) for correctness check.
# ---------------------------------------------------------------------------
def clip_loss_ref(image, text_ids, params):
    B, C, H, W = image.shape
    p = params['patch']
    Ph, Pw = H // p, W // p
    patches = image.reshape(B, C, Ph, p, Pw, p)
    patches = jnp.transpose(patches, (0, 2, 4, 1, 3, 5)).reshape(B, Ph * Pw, C * p * p)
    h = jnp.einsum('bpd,dw->bpw', patches, params['w_patch'])
    img_feat = jnp.mean(h, axis=1) @ params['img_proj']
    txt_emb = jnp.take(params['tok_embed'], text_ids, axis=0)
    txt_feat = jnp.mean(txt_emb, axis=1) @ params['txt_proj']
    img_n = img_feat / jnp.linalg.norm(img_feat, axis=-1, keepdims=True)
    txt_n = txt_feat / jnp.linalg.norm(txt_feat, axis=-1, keepdims=True)
    logits = params['logit_scale'][0, 0] * img_n @ txt_n.T
    return 1.0 - logits / 100.0


if __name__ == "__main__":
    # Small, deterministic config.
    B, C, Himg, Wimg = 2, 3, 32, 32
    patch = 8
    width = 128        # encoder width
    embed_dim = 128    # joint embedding dim
    L = 8              # text sequence length
    vocab = 64

    key = jax.random.PRNGKey(0)
    k_img, k_txt, k_wp, k_ip, k_tp, k_emb = jax.random.split(key, 6)

    image = jax.random.normal(k_img, (B, C, Himg, Wimg), dtype=jnp.float32)
    text_ids = jax.random.randint(k_txt, (B, L), 0, vocab, dtype=jnp.int32)

    Dp = C * patch * patch
    params = {
        'patch': patch,
        'w_patch': 0.02 * jax.random.normal(k_wp, (Dp, width), dtype=jnp.float32),
        'img_proj': 0.02 * jax.random.normal(k_ip, (width, embed_dim), dtype=jnp.float32),
        'txt_proj': 0.02 * jax.random.normal(k_tp, (width, embed_dim), dtype=jnp.float32),
        'tok_embed': 0.02 * jax.random.normal(k_emb, (vocab, width), dtype=jnp.float32),
        # pretrained CLIP's logit_scale.exp() saturates at 100.0
        'logit_scale': jnp.full((1, 1), 100.0, dtype=jnp.float32),
    }

    folded = fold_params(params, image.shape)

    out = clip_loss(image, text_ids, folded)
    out = jax.block_until_ready(out)

    ref = clip_loss_ref(image, text_ids, params)
    # bf16 matmul operands (f32 accumulation) => loosened tolerance vs the f32 reference.
    np.testing.assert_allclose(np.asarray(out), np.asarray(ref), rtol=2e-2, atol=2e-2)

    print("KERNEL_OK")
</pallas_src>

<mosaic_0001>
module attributes {stable_mosaic.version = 11 : i64} {
  func.func @clip_loss_kernel(%arg0: i32, %arg1: i32, %arg2: memref<2x3072xbf16, #tpu.memory_space<vmem>>, %arg3: memref<3072x128xbf16, #tpu.memory_space<vmem>>, %arg4: memref<2x8xi32, #tpu.memory_space<vmem>>, %arg5: memref<128x128xbf16, #tpu.memory_space<vmem>>, %arg6: memref<1x1xf32, #tpu.memory_space<smem>>, %arg7: memref<2x2xf32, #tpu.memory_space<vmem>>) attributes {dimension_semantics = [#tpu.dimension_semantics<parallel>, #tpu.dimension_semantics<parallel>], iteration_bounds = array<i64: 1, 1>, scalar_prefetch = 0 : i64, scratch_operands = 0 : i64, tpu.core_type = #tpu.core_type<tc>, window_params = [{transform_indices = @transform_0, window_bounds = array<i64: 2, 3072>}, {pipeline_mode = #tpu.pipeline_mode<synchronous>, transform_indices = @transform_1, window_bounds = array<i64: 3072, 128>}, {transform_indices = @transform_2, window_bounds = array<i64: 2, 8>}, {pipeline_mode = #tpu.pipeline_mode<synchronous>, transform_indices = @transform_3, window_bounds = array<i64: 128, 128>}, {transform_indices = @transform_4, window_bounds = array<i64: 1, 1>}, {transform_indices = @transform_5, window_bounds = array<i64: 2, 2>}]} {
    %c0 = arith.constant 0 : index
    %c0_0 = arith.constant 0 : index
    %0 = vector.load %arg2[%c0, %c0_0] : memref<2x3072xbf16, #tpu.memory_space<vmem>>, vector<2x3072xbf16>
    %c0_1 = arith.constant 0 : index
    %c0_2 = arith.constant 0 : index
    %1 = vector.load %arg3[%c0_1, %c0_2] : memref<3072x128xbf16, #tpu.memory_space<vmem>>, vector<3072x128xbf16>
    %cst = arith.constant dense<0.000000e+00> : vector<2x128xf32>
    %2 = tpu.matmul %0, %1, %cst {dimension_numbers = #tpu.dot_dimension_numbers<[1], [0], [0], [1], [0, 0, 1, 1], [], []>} : vector<2x3072xbf16>, vector<3072x128xbf16>, vector<2x128xf32> -> vector<2x128xf32>
    %c0_3 = arith.constant 0 : index
    %c0_4 = arith.constant 0 : index
    %3 = vector.load %arg4[%c0_3, %c0_4] : memref<2x8xi32, #tpu.memory_space<vmem>>, vector<2x8xi32>
    %4 = tpu.iota {dimensions = array<i32: 2>} : vector<2x8x128xi32>
    %5 = vector.shape_cast %3 : vector<2x8xi32> to vector<2x8x1xi32>
    %6 = vector.broadcast %5 : vector<2x8x1xi32> to vector<2x8x128xi32>
    %7 = arith.cmpi eq, %6, %4 : vector<2x8x128xi32>
    %8 = arith.extui %7 : vector<2x8x128xi1> to vector<2x8x128xi32>
    %9 = arith.sitofp %8 : vector<2x8x128xi32> to vector<2x8x128xf32>
    %cst_5 = arith.constant dense<0.000000e+00> : vector<2x128xf32>
    %10 = vector.multi_reduction <add>, %9, %cst_5 [1] : vector<2x8x128xf32> to vector<2x128xf32>
    %11 = arith.truncf %10 : vector<2x128xf32> to vector<2x128xbf16>
    %c0_6 = arith.constant 0 : index
    %c0_7 = arith.constant 0 : index
    %12 = vector.load %arg5[%c0_6, %c0_7] : memref<128x128xbf16, #tpu.memory_space<vmem>>, vector<128x128xbf16>
    %cst_8 = arith.constant dense<0.000000e+00> : vector<2x128xf32>
    %13 = tpu.matmul %11, %12, %cst_8 {dimension_numbers = #tpu.dot_dimension_numbers<[1], [0], [0], [1], [0, 0, 1, 1], [], []>} : vector<2x128xbf16>, vector<128x128xbf16>, vector<2x128xf32> -> vector<2x128xf32>
    %cst_9 = arith.constant 1.250000e-01 : f32
    %14 = vector.broadcast %cst_9 : f32 to vector<2x128xf32>
    %15 = arith.mulf %13, %14 : vector<2x128xf32>
    %c0_10 = arith.constant 0 : index
    %c0_11 = arith.constant 0 : index
    %16 = memref.load %arg6[%c0_10, %c0_11] : memref<1x1xf32, #tpu.memory_space<smem>>
    %cst_12 = arith.constant 0.00999999977 : f32
    %17 = arith.mulf %16, %cst_12 : f32
    %18 = arith.mulf %2, %2 : vector<2x128xf32>
    %cst_13 = arith.constant dense<0.000000e+00> : vector<2xf32>
    %19 = vector.multi_reduction <add>, %18, %cst_13 [1] : vector<2x128xf32> to vector<2xf32>
    %20 = vector.shape_cast %19 : vector<2xf32> to vector<2x1xf32>
    %21 = math.rsqrt %20 : vector<2x1xf32>
    %22 = vector.broadcast %17 : f32 to vector<2x1xf32>
    %23 = arith.mulf %21, %22 : vector<2x1xf32>
    %24 = vector.broadcast %23 : vector<2x1xf32> to vector<2x128xf32>
    %25 = arith.mulf %2, %24 : vector<2x128xf32>
    %26 = arith.mulf %15, %15 : vector<2x128xf32>
    %cst_14 = arith.constant dense<0.000000e+00> : vector<2xf32>
    %27 = vector.multi_reduction <add>, %26, %cst_14 [1] : vector<2x128xf32> to vector<2xf32>
    %28 = vector.shape_cast %27 : vector<2xf32> to vector<2x1xf32>
    %29 = math.rsqrt %28 : vector<2x1xf32>
    %30 = vector.broadcast %29 : vector<2x1xf32> to vector<2x128xf32>
    %31 = arith.mulf %15, %30 : vector<2x128xf32>
    %32 = vector.shape_cast %25 : vector<2x128xf32> to vector<2x1x128xf32>
    %33 = vector.shape_cast %31 : vector<2x128xf32> to vector<1x2x128xf32>
    %34 = vector.broadcast %32 : vector<2x1x128xf32> to vector<2x2x128xf32>
    %35 = vector.broadcast %33 : vector<1x2x128xf32> to vector<2x2x128xf32>
    %36 = arith.mulf %34, %35 : vector<2x2x128xf32>
    %cst_15 = arith.constant dense<0.000000e+00> : vector<2x2xf32>
    %37 = vector.multi_reduction <add>, %36, %cst_15 [2] : vector<2x2x128xf32> to vector<2x2xf32>
    %cst_16 = arith.constant 1.000000e+00 : f32
    %38 = vector.broadcast %cst_16 : f32 to vector<2x2xf32>
    %39 = arith.subf %38, %37 : vector<2x2xf32>
    %c0_17 = arith.constant 0 : index
    %c0_18 = arith.constant 0 : index
    %40 = vector.load %arg7[%c0_17, %c0_18] : memref<2x2xf32, #tpu.memory_space<vmem>>, vector<2x2xf32>
    tpu.vector_store %arg7[%c0_17, %c0_18], %39 {strides = array<i32>} : memref<2x2xf32, #tpu.memory_space<vmem>>, vector<2x2xf32>,
    return
  }
  func.func @transform_0(%arg0: i32, %arg1: i32) -> (i32, i32) {
    %c0_i32 = arith.constant 0 : i32
    %c0_i32_0 = arith.constant 0 : i32
    return %arg0, %c0_i32 : i32, i32
  }
  func.func @transform_1(%arg0: i32, %arg1: i32) -> (i32, i32) {
    %c0_i32 = arith.constant 0 : i32
    %c0_i32_0 = arith.constant 0 : i32
    %c0_i32_1 = arith.constant 0 : i32
    return %c0_i32, %c0_i32_0 : i32, i32
  }
  func.func @transform_2(%arg0: i32, %arg1: i32) -> (i32, i32) {
    %c0_i32 = arith.constant 0 : i32
    %c0_i32_0 = arith.constant 0 : i32
    return %arg1, %c0_i32 : i32, i32
  }
  func.func @transform_3(%arg0: i32, %arg1: i32) -> (i32, i32) {
    %c0_i32 = arith.constant 0 : i32
    %c0_i32_0 = arith.constant 0 : i32
    %c0_i32_1 = arith.constant 0 : i32
    return %c0_i32, %c0_i32_0 : i32, i32
  }
  func.func @transform_4(%arg0: i32, %arg1: i32) -> (i32, i32) {
    %c0_i32 = arith.constant 0 : i32
    %c0_i32_0 = arith.constant 0 : i32
    %c0_i32_1 = arith.constant 0 : i32
    return %c0_i32, %c0_i32_0 : i32, i32
  }
  func.func @transform_5(%arg0: i32, %arg1: i32) -> (i32, i32) {
    %c0_i32 = arith.constant 0 : i32
    return %arg0, %arg1 : i32, i32
  }
}

</mosaic_0001>

<llo_original>
// kernel: tpu_custom_call.1
$region0: #{tpu_custom_call.1}
  #allocation0 [shape = 'u32[]', space=smem, size = 0x4, offset = 0x4, fixed_abs, tag = 'smem constant byte address 0x4 - core index']
  #allocation1 [shape = 'u32[144,128]{1,0:T(1,128)}', space=vmem, size = 0x12000, scoped, tag = 'internal scratch']
  #allocation2 [shape = 'f32[1,1]{1,0:T(1,128)S(6)}', space=smem, size = 0x200, scoped, tag = 'scoped memory for tpu_custom_call.1']
  %s0 = inlined_call_operand.hbm [shape: bf16[2,3072], index: 0, kind: input, shape index: {}]
  %s1 = inlined_call_operand.hbm [shape: bf16[3072,128], index: 1, kind: input, shape index: {}]
  %s2 = inlined_call_operand.vmem [shape: s32[2,8], index: 2, kind: input, shape index: {}]
  %s3 = inlined_call_operand.hbm [shape: bf16[128,128], index: 3, kind: input, shape index: {}]
  %s4 = inlined_call_operand.<no memory space> [shape: f32[1,1], index: 4, kind: input, shape index: {}]
  %s5 = inlined_call_operand.hbm [shape: f32[2,2], index: 5, kind: output, shape index: {}]
  %s6 = sld [smem:[#allocation0]]
  $region42: #{tpu_custom_call.1} parent=0
    _
  %s8 = ssub.s32 1, %s6
  %s9 = scalar_select 0, %s8, %s6
  %10 = sst [smem:[#allocation2]] %s4
  $region1: #{tpu_custom_call.1} parent=0
    #allocation3 [shape = 'u8[12288]{0}', space=vmem, size = 0x3000, scoped, tag = 'input window, operand 0, single buffered']
    #allocation4 [shape = 's32[1]{0}', space=sflag, size = 0x4, scoped, tag = 'scoped memory for tpu_custom_call.1']
    #allocation5 [shape = 's32[1]{0}', space=sflag, size = 0x4, scoped, tag = 'scoped memory for tpu_custom_call.1']
    #allocation6 [shape = 'u8[786432]{0}', space=vmem, size = 0xc0000, scoped, tag = 'input window, operand 1, single buffered']
    #allocation7 [shape = 's32[1]{0}', space=sflag, size = 0x4, scoped, tag = 'scoped memory for tpu_custom_call.1']
    #allocation8 [shape = 'u8[32768]{0}', space=vmem, size = 0x8000, scoped, tag = 'input window, operand 3, single buffered']
    #allocation9 [shape = 'u8[1024]{0}', space=vmem, size = 0x400, scoped, tag = 'output window, operand 0, single buffered']
    %11 = vsyncpa [#allocation4], 0
    %12 = vsyncpa [#allocation7], 0
    %13 = vsyncpa [#allocation5], 0
    // Predicated region
    $region2: #{tpu_custom_call.1} parent=1 // pred_check
      _
    $region3: #{tpu_custom_call.1} parent=1 // pred_check_branch
      %15 = sbr.rel (0) target = $region5
    $region4: #{tpu_custom_call.1} parent=1 // pred_region
      %s17 = ssub.s32 384, 384
      %18 = vsyncadd [#allocation4], %s17
      %s20 = sshll.u32 [#allocation3], 4
      %s21 = int_to_ptr.vmem [resolvable:$true] %s20
      %23 = dma.hbm_to_vmem [thread:$0]  %s0, 384, %s21, [#allocation4]
    $region5: #{tpu_custom_call.1} parent=1 // pred_fallthru
      _
    // Predicated region
    $region6: #{tpu_custom_call.1} parent=1 // pred_check
      _
    $region7: #{tpu_custom_call.1} parent=1 // pred_check_branch
      %25 = sbr.rel (0) target = $region9
    $region8: #{tpu_custom_call.1} parent=1 // pred_region
      %s27 = ssub.s32 24576, 24576
      %28 = vsyncadd [#allocation7], %s27
      %s29 = sshll.u32 [#allocation6], 4
      %s30 = int_to_ptr.vmem [resolvable:$true] %s29
      %35 = dma.hbm_to_vmem [thread:$0]  %s1, 24576, %s30, [#allocation7], 64, 64, 4
    $region9: #{tpu_custom_call.1} parent=1 // pred_fallthru
      _
    // Predicated region
    $region10: #{tpu_custom_call.1} parent=1 // pred_check
      _
    $region11: #{tpu_custom_call.1} parent=1 // pred_check_branch
      %37 = sbr.rel (0) target = $region13
    $region12: #{tpu_custom_call.1} parent=1 // pred_region
      _
    $region13: #{tpu_custom_call.1} parent=1 // pred_fallthru
      _
    // Predicated region
    $region14: #{tpu_custom_call.1} parent=1 // pred_check
      _
    $region15: #{tpu_custom_call.1} parent=1 // pred_check_branch
      %39 = sbr.rel (0) target = $region17
    $region16: #{tpu_custom_call.1} parent=1 // pred_region
      %s41 = ssub.s32 1024, 1024
      %42 = vsyncadd [#allocation7], %s41
      %s43 = sshll.u32 [#allocation8], 4
      %s44 = int_to_ptr.vmem [resolvable:$true] %s43
      %49 = dma.hbm_to_vmem [thread:$0]  %s3, 1024, %s44, [#allocation7], 64, 64, 4
    $region17: #{tpu_custom_call.1} parent=1 // pred_fallthru
      _
    // Predicated region
    $region18: #{tpu_custom_call.1} parent=1 // pred_check
      _
    $region19: #{tpu_custom_call.1} parent=1 // pred_check_branch
      %51 = sbr.rel (0) target = $region21
    $region20: #{tpu_custom_call.1} parent=1 // pred_region
      _
    $region21: #{tpu_custom_call.1} parent=1 // pred_fallthru
      _
    // Predicated region
    $region22: #{tpu_custom_call.1} parent=1 // pred_check
      _
    $region23: #{tpu_custom_call.1} parent=1 // pred_check_branch
      %53 = sbr.rel (0) target = $region25
    $region24: #{tpu_custom_call.1} parent=1 // pred_region
      %54 = dma.done [#allocation4], 384
    $region25: #{tpu_custom_call.1} parent=1 // pred_fallthru
      _
    // Predicated region
    $region26: #{tpu_custom_call.1} parent=1 // pred_check
      _
    $region27: #{tpu_custom_call.1} parent=1 // pred_check_branch
      %56 = sbr.rel (0) target = $region29
    $region28: #{tpu_custom_call.1} parent=1 // pred_region
      %57 = dma.done [#allocation7], 24576
    $region29: #{tpu_custom_call.1} parent=1 // pred_fallthru
      _
    // Predicated region
    $region30: #{tpu_custom_call.1} parent=1 // pred_check
      _
    $region31: #{tpu_custom_call.1} parent=1 // pred_check_branch
      %59 = sbr.rel (0) target = $region33
    $region32: #{tpu_custom_call.1} parent=1 // pred_region
      %60 = dma.done [#allocation7], 1024
    $region33: #{tpu_custom_call.1} parent=1 // pred_fallthru
      _
    %v62 = vld [vmem:[#allocation3] sm:$0xff]
    %v63 = vld [vmem:[#allocation3 + $0x8] sm:$0xff]
    %v64 = vld [vmem:[#allocation3 + $0x10] sm:$0xff]
    %v65 = vld [vmem:[#allocation6] sm:$0xf]
    %v66 = vld [vmem:[#allocation6 + $0x4] sm:$0xf]
    %v67 = vld [vmem:[#allocation6 + $0x8] sm:$0xf]
    %v68 = vld [vmem:[#allocation6 + $0xc] sm:$0xf]
    %v69 = vld [vmem:[#allocation6 + $0x10] sm:$0xf]
    %v70 = vld [vmem:[#allocation6 + $0x14] sm:$0xf]
    %v71 = vld [vmem:[#allocation6 + $0x18] sm:$0xf]
    %v72 = vld [vmem:[#allocation6 + $0x1c] sm:$0xf]
    %v73 = vld [vmem:[#allocation6 + $0x20] sm:$0xf]
    %v74 = vld [vmem:[#allocation6 + $0x24] sm:$0xf]
    %v75 = vld [vmem:[#allocation6 + $0x28] sm:$0xf]
    %v76 = vld [vmem:[#allocation6 + $0x2c] sm:$0xf]
    %v77 = vld [vmem:[#allocation6 + $0x30] sm:$0xf]
    %v78 = vld [vmem:[#allocation6 + $0x34] sm:$0xf]
    %v79 = vld [vmem:[#allocation6 + $0x38] sm:$0xf]
    %v80 = vld [vmem:[#allocation6 + $0x3c] sm:$0xf]
    %v81 = vld [vmem:[#allocation6 + $0x40] sm:$0xf]
    %v82 = vld [vmem:[#allocation6 + $0x44] sm:$0xf]
    %v83 = vld [vmem:[#allocation6 + $0x48] sm:$0xf]
    %v84 = vld [vmem:[#allocation6 + $0x4c] sm:$0xf]
    %v85 = vld [vmem:[#allocation6 + $0x50] sm:$0xf]
    %v86 = vld [vmem:[#allocation6 + $0x54] sm:$0xf]
    %v87 = vld [vmem:[#allocation6 + $0x58] sm:$0xf]
    %v88 = vld [vmem:[#allocation6 + $0x5c] sm:$0xf]
    %v89 = vld [vmem:[#allocation6 + $0x60] sm:$0xf]
    %v90 = vld [vmem:[#allocation6 + $0x64] sm:$0xf]
    %v91 = vld [vmem:[#allocation6 + $0x68] sm:$0xf]
    %v92 = vld [vmem:[#allocation6 + $0x6c] sm:$0xf]
    %v93 = vld [vmem:[#allocation6 + $0x70] sm:$0xf]
    %v94 = vld [vmem:[#allocation6 + $0x74] sm:$0xf]
    %v95 = vld [vmem:[#allocation6 + $0x78] sm:$0xf]
    %v96 = vld [vmem:[#allocation6 + $0x7c] sm:$0xf]
    %v97 = vld [vmem:[#allocation6 + $0x80] sm:$0xf]
    %v98 = vld [vmem:[#allocation6 + $0x84] sm:$0xf]
    %v99 = vld [vmem:[#allocation6 + $0x88] sm:$0xf]
    %v100 = vld [vmem:[#allocation6 + $0x8c] sm:$0xf]
    %v101 = vld [vmem:[#allocation6 + $0x90] sm:$0xf]
    %v102 = vld [vmem:[#allocation6 + $0x94] sm:$0xf]
    %v103 = vld [vmem:[#allocation6 + $0x98] sm:$0xf]
    %v104 = vld [vmem:[#allocation6 + $0x9c] sm:$0xf]
    %v105 = vld [vmem:[#allocation6 + $0xa0] sm:$0xf]
    %v106 = vld [vmem:[#allocation6 + $0xa4] sm:$0xf]
    %v107 = vld [vmem:[#allocation6 + $0xa8] sm:$0xf]
    %v108 = vld [vmem:[#allocation6 + $0xac] sm:$0xf]
    %v109 = vld [vmem:[#allocation6 + $0xb0] sm:$0xf]
    %v110 = vld [vmem:[#allocation6 + $0xb4] sm:$0xf]
    %v111 = vld [vmem:[#allocation6 + $0xb8] sm:$0xf]
    %v112 = vld [vmem:[#allocation6 + $0xbc] sm:$0xf]
    %v113 = vld [vmem:[#allocation6 + $0xc0] sm:$0xf]
    %v114 = vld [vmem:[#allocation6 + $0xc4] sm:$0xf]
    %v115 = vld [vmem:[#allocation6 + $0xc8] sm:$0xf]
    %v116 = vld [vmem:[#allocation6 + $0xcc] sm:$0xf]
    %v117 = vld [vmem:[#allocation6 + $0xd0] sm:$0xf]
    %v118 = vld [vmem:[#allocation6 + $0xd4] sm:$0xf]
    %v119 = vld [vmem:[#allocation6 + $0xd8] sm:$0xf]
    %v120 = vld [vmem:[#allocation6 + $0xdc] sm:$0xf]
    %v121 = vld [vmem:[#allocation6 + $0xe0] sm:$0xf]
    %v122 = vld [vmem:[#allocation6 + $0xe4] sm:$0xf]
    %v123 = vld [vmem:[#allocation6 + $0xe8] sm:$0xf]
    %v124 = vld [vmem:[#allocation6 + $0xec] sm:$0xf]
    %v125 = vld [vmem:[#allocation6 + $0xf0] sm:$0xf]
    %v126 = vld [vmem:[#allocation6 + $0xf4] sm:$0xf]
    %v127 = vld [vmem:[#allocation6 + $0xf8] sm:$0xf]
    %v128 = vld [vmem:[#allocation6 + $0xfc] sm:$0xf]
    %v129 = vld [vmem:[#allocation6 + $0x100] sm:$0xf]
    %v130 = vld [vmem:[#allocation6 + $0x104] sm:$0xf]
    %v131 = vld [vmem:[#allocation6 + $0x108] sm:$0xf]
    %v132 = vld [vmem:[#allocation6 + $0x10c] sm:$0xf]
    %v133 = vld [vmem:[#allocation6 + $0x110] sm:$0xf]
    %v134 = vld [vmem:[#allocation6 + $0x114] sm:$0xf]
    %v135 = vld [vmem:[#allocation6 + $0x118] sm:$0xf]
    %v136 = vld [vmem:[#allocation6 + $0x11c] sm:$0xf]
    %v137 = vld [vmem:[#allocation6 + $0x120] sm:$0xf]
    %v138 = vld [vmem:[#allocation6 + $0x124] sm:$0xf]
    %v139 = vld [vmem:[#allocation6 + $0x128] sm:$0xf]
    %v140 = vld [vmem:[#allocation6 + $0x12c] sm:$0xf]
    %v141 = vld [vmem:[#allocation6 + $0x130] sm:$0xf]
    %v142 = vld [vmem:[#allocation6 + $0x134] sm:$0xf]
    %v143 = vld [vmem:[#allocation6 + $0x138] sm:$0xf]
    %v144 = vld [vmem:[#allocation6 + $0x13c] sm:$0xf]
    %v145 = vld [vmem:[#allocation6 + $0x140] sm:$0xf]
    %v146 = vld [vmem:[#allocation6 + $0x144] sm:$0xf]
    %v147 = vld [vmem:[#allocation6 + $0x148] sm:$0xf]
    %v148 = vld [vmem:[#allocation6 + $0x14c] sm:$0xf]
    %v149 = vld [vmem:[#allocation6 + $0x150] sm:$0xf]
    %v150 = vld [vmem:[#allocation6 + $0x154] sm:$0xf]
    %v151 = vld [vmem:[#allocation6 + $0x158] sm:$0xf]
    %v152 = vld [vmem:[#allocation6 + $0x15c] sm:$0xf]
    %v153 = vld [vmem:[#allocation6 + $0x160] sm:$0xf]
    %v154 = vld [vmem:[#allocation6 + $0x164] sm:$0xf]
    %v155 = vld [vmem:[#allocation6 + $0x168] sm:$0xf]
    %v156 = vld [vmem:[#allocation6 + $0x16c] sm:$0xf]
    %v157 = vld [vmem:[#allocation6 + $0x170] sm:$0xf]
    %v158 = vld [vmem:[#allocation6 + $0x174] sm:$0xf]
    %v159 = vld [vmem:[#allocation6 + $0x178] sm:$0xf]
    %v160 = vld [vmem:[#allocation6 + $0x17c] sm:$0xf]
    %v161 = vld [vmem:[#allocation6 + $0x180] sm:$0xf]
    %v162 = vld [vmem:[#allocation6 + $0x184] sm:$0xf]
    %v163 = vld [vmem:[#allocation6 + $0x188] sm:$0xf]
    %v164 = vld [vmem:[#allocation6 + $0x18c] sm:$0xf]
    %v165 = vld [vmem:[#allocation6 + $0x190] sm:$0xf]
    %v166 = vld [vmem:[#allocation6 + $0x194] sm:$0xf]
    %v167 = vld [vmem:[#allocation6 + $0x198] sm:$0xf]
    %v168 = vld [vmem:[#allocation6 + $0x19c] sm:$0xf]
    %v169 = vld [vmem:[#allocation6 + $0x1a0] sm:$0xf]
    %v170 = vld [vmem:[#allocation6 + $0x1a4] sm:$0xf]
    %v171 = vld [vmem:[#allocation6 + $0x1a8] sm:$0xf]
    %v172 = vld [vmem:[#allocation6 + $0x1ac] sm:$0xf]
    %v173 = vld [vmem:[#allocation6 + $0x1b0] sm:$0xf]
    %v174 = vld [vmem:[#allocation6 + $0x1b4] sm:$0xf]
    %v175 = vld [vmem:[#allocation6 + $0x1b8] sm:$0xf]
    %v176 = vld [vmem:[#allocation6 + $0x1bc] sm:$0xf]
    %v177 = vld [vmem:[#allocation6 + $0x1c0] sm:$0xf]
    %v178 = vld [vmem:[#allocation6 + $0x1c4] sm:$0xf]
    %v179 = vld [vmem:[#allocation6 + $0x1c8] sm:$0xf]
    %v180 = vld [vmem:[#allocation6 + $0x1cc] sm:$0xf]
    %v181 = vld [vmem:[#allocation6 + $0x1d0] sm:$0xf]
    %v182 = vld [vmem:[#allocation6 + $0x1d4] sm:$0xf]
    %v183 = vld [vmem:[#allocation6 + $0x1d8] sm:$0xf]
    %v184 = vld [vmem:[#allocation6 + $0x1dc] sm:$0xf]
    %v185 = vld [vmem:[#allocation6 + $0x1e0] sm:$0xf]
    %v186 = vld [vmem:[#allocation6 + $0x1e4] sm:$0xf]
    %v187 = vld [vmem:[#allocation6 + $0x1e8] sm:$0xf]
    %v188 = vld [vmem:[#allocation6 + $0x1ec] sm:$0xf]
    %v189 = vld [vmem:[#allocation6 + $0x1f0] sm:$0xf]
    %v190 = vld [vmem:[#allocation6 + $0x1f4] sm:$0xf]
    %v191 = vld [vmem:[#allocation6 + $0x1f8] sm:$0xf]
    %v192 = vld [vmem:[#allocation6 + $0x1fc] sm:$0xf]
    %v193 = vld [vmem:[#allocation6 + $0x200] sm:$0xf]
    %v194 = vld [vmem:[#allocation6 + $0x204] sm:$0xf]
    %v195 = vld [vmem:[#allocation6 + $0x208] sm:$0xf]
    %v196 = vld [vmem:[#allocation6 + $0x20c] sm:$0xf]
    %v197 = vld [vmem:[#allocation6 + $0x210] sm:$0xf]
    %v198 = vld [vmem:[#allocation6 + $0x214] sm:$0xf]
    %v199 = vld [vmem:[#allocation6 + $0x218] sm:$0xf]
    %v200 = vld [vmem:[#allocation6 + $0x21c] sm:$0xf]
    %v201 = vld [vmem:[#allocation6 + $0x220] sm:$0xf]
    %v202 = vld [vmem:[#allocation6 + $0x224] sm:$0xf]
    %v203 = vld [vmem:[#allocation6 + $0x228] sm:$0xf]
    %v204 = vld [vmem:[#allocation6 + $0x22c] sm:$0xf]
    %v205 = vld [vmem:[#allocation6 + $0x230] sm:$0xf]
    %v206 = vld [vmem:[#allocation6 + $0x234] sm:$0xf]
    %v207 = vld [vmem:[#allocation6 + $0x238] sm:$0xf]
    %v208 = vld [vmem:[#allocation6 + $0x23c] sm:$0xf]
    %v209 = vld [vmem:[#allocation6 + $0x240] sm:$0xf]
    %v210 = vld [vmem:[#allocation6 + $0x244] sm:$0xf]
    %v211 = vld [vmem:[#allocation6 + $0x248] sm:$0xf]
    %v212 = vld [vmem:[#allocation6 + $0x24c] sm:$0xf]
    %v213 = vld [vmem:[#allocation6 + $0x250] sm:$0xf]
    %v214 = vld [vmem:[#allocation6 + $0x254] sm:$0xf]
    %v215 = vld [vmem:[#allocation6 + $0x258] sm:$0xf]
    %v216 = vld [vmem:[#allocation6 + $0x25c] sm:$0xf]
    %v217 = vld [vmem:[#allocation6 + $0x260] sm:$0xf]
    %v218 = vld [vmem:[#allocation6 + $0x264] sm:$0xf]
    %v219 = vld [vmem:[#allocation6 + $0x268] sm:$0xf]
    %v220 = vld [vmem:[#allocation6 + $0x26c] sm:$0xf]
    %v221 = vld [vmem:[#allocation6 + $0x270] sm:$0xf]
    %v222 = vld [vmem:[#allocation6 + $0x274] sm:$0xf]
    %v223 = vld [vmem:[#allocation6 + $0x278] sm:$0xf]
    %v224 = vld [vmem:[#allocation6 + $0x27c] sm:$0xf]
    %v225 = vld [vmem:[#allocation6 + $0x280] sm:$0xf]
    %v226 = vld [vmem:[#allocation6 + $0x284] sm:$0xf]
    %v227 = vld [vmem:[#allocation6 + $0x288] sm:$0xf]
    %v228 = vld [vmem:[#allocation6 + $0x28c] sm:$0xf]
    %v229 = vld [vmem:[#allocation6 + $0x290] sm:$0xf]
    %v230 = vld [vmem:[#allocation6 + $0x294] sm:$0xf]
    %v231 = vld [vmem:[#allocation6 + $0x298] sm:$0xf]
    %v232 = vld [vmem:[#allocation6 + $0x29c] sm:$0xf]
    %v233 = vld [vmem:[#allocation6 + $0x2a0] sm:$0xf]
    %v234 = vld [vmem:[#allocation6 + $0x2a4] sm:$0xf]
    %v235 = vld [vmem:[#allocation6 + $0x2a8] sm:$0xf]
    %v236 = vld [vmem:[#allocation6 + $0x2ac] sm:$0xf]
    %v237 = vld [vmem:[#allocation6 + $0x2b0] sm:$0xf]
    %v238 = vld [vmem:[#allocation6 + $0x2b4] sm:$0xf]
    %v239 = vld [vmem:[#allocation6 + $0x2b8] sm:$0xf]
    %v240 = vld [vmem:[#allocation6 + $0x2bc] sm:$0xf]
    %v241 = vld [vmem:[#allocation6 + $0x2c0] sm:$0xf]
    %v242 = vld [vmem:[#allocation6 + $0x2c4] sm:$0xf]
    %v243 = vld [vmem:[#allocation6 + $0x2c8] sm:$0xf]
    %v244 = vld [vmem:[#allocation6 + $0x2cc] sm:$0xf]
    %v245 = vld [vmem:[#allocation6 + $0x2d0] sm:$0xf]
    %v246 = vld [vmem:[#allocation6 + $0x2d4] sm:$0xf]
    %v247 = vld [vmem:[#allocation6 + $0x2d8] sm:$0xf]
    %v248 = vld [vmem:[#allocation6 + $0x2dc] sm:$0xf]
    %v249 = vld [vmem:[#allocation6 + $0x2e0] sm:$0xf]
    %v250 = vld [vmem:[#allocation6 + $0x2e4] sm:$0xf]
    %v251 = vld [vmem:[#allocation6 + $0x2e8] sm:$0xf]
    %v252 = vld [vmem:[#allocation6 + $0x2ec] sm:$0xf]
    %v253 = vld [vmem:[#allocation6 + $0x2f0] sm:$0xf]
    %v254 = vld [vmem:[#allocation6 + $0x2f4] sm:$0xf]
    %v255 = vld [vmem:[#allocation6 + $0x2f8] sm:$0xf]
    %v256 = vld [vmem:[#allocation6 + $0x2fc] sm:$0xf]
    %v257 = vld [vmem:[#allocation6 + $0x300] sm:$0xf]
    %v258 = vld [vmem:[#allocation6 + $0x304] sm:$0xf]
    %v259 = vld [vmem:[#allocation6 + $0x308] sm:$0xf]
    %v260 = vld [vmem:[#allocation6 + $0x30c] sm:$0xf]
    %v261 = vld [vmem:[#allocation6 + $0x310] sm:$0xf]
    %v262 = vld [vmem:[#allocation6 + $0x314] sm:$0xf]
    %v263 = vld [vmem:[#allocation6 + $0x318] sm:$0xf]
    %v264 = vld [vmem:[#allocation6 + $0x31c] sm:$0xf]
    %v265 = vld [vmem:[#allocation6 + $0x320] sm:$0xf]
    %v266 = vld [vmem:[#allocation6 + $0x324] sm:$0xf]
    %v267 = vld [vmem:[#allocation6 + $0x328] sm:$0xf]
    %v268 = vld [vmem:[#allocation6 + $0x32c] sm:$0xf]
    %v269 = vld [vmem:[#allocation6 + $0x330] sm:$0xf]
    %v270 = vld [vmem:[#allocation6 + $0x334] sm:$0xf]
    %v271 = vld [vmem:[#allocation6 + $0x338] sm:$0xf]
    %v272 = vld [vmem:[#allocation6 + $0x33c] sm:$0xf]
    %v273 = vld [vmem:[#allocation6 + $0x340] sm:$0xf]
    %v274 = vld [vmem:[#allocation6 + $0x344] sm:$0xf]
    %v275 = vld [vmem:[#allocation6 + $0x348] sm:$0xf]
    %v276 = vld [vmem:[#allocation6 + $0x34c] sm:$0xf]
    %v277 = vld [vmem:[#allocation6 + $0x350] sm:$0xf]
    %v278 = vld [vmem:[#allocation6 + $0x354] sm:$0xf]
    %v279 = vld [vmem:[#allocation6 + $0x358] sm:$0xf]
    %v280 = vld [vmem:[#allocation6 + $0x35c] sm:$0xf]
    %v281 = vld [vmem:[#allocation6 + $0x360] sm:$0xf]
    %v282 = vld [vmem:[#allocation6 + $0x364] sm:$0xf]
    %v283 = vld [vmem:[#allocation6 + $0x368] sm:$0xf]
    %v284 = vld [vmem:[#allocation6 + $0x36c] sm:$0xf]
    %v285 = vld [vmem:[#allocation6 + $0x370] sm:$0xf]
    %v286 = vld [vmem:[#allocation6 + $0x374] sm:$0xf]
    %v287 = vld [vmem:[#allocation6 + $0x378] sm:$0xf]
    %v288 = vld [vmem:[#allocation6 + $0x37c] sm:$0xf]
    %v289 = vld [vmem:[#allocation6 + $0x380] sm:$0xf]
    %v290 = vld [vmem:[#allocation6 + $0x384] sm:$0xf]
    %v291 = vld [vmem:[#allocation6 + $0x388] sm:$0xf]
    %v292 = vld [vmem:[#allocation6 + $0x38c] sm:$0xf]
    %v293 = vld [vmem:[#allocation6 + $0x390] sm:$0xf]
    %v294 = vld [vmem:[#allocation6 + $0x394] sm:$0xf]
    %v295 = vld [vmem:[#allocation6 + $0x398] sm:$0xf]
    %v296 = vld [vmem:[#allocation6 + $0x39c] sm:$0xf]
    %v297 = vld [vmem:[#allocation6 + $0x3a0] sm:$0xf]
    %v298 = vld [vmem:[#allocation6 + $0x3a4] sm:$0xf]
    %v299 = vld [vmem:[#allocation6 + $0x3a8] sm:$0xf]
    %v300 = vld [vmem:[#allocation6 + $0x3ac] sm:$0xf]
    %v301 = vld [vmem:[#allocation6 + $0x3b0] sm:$0xf]
    %v302 = vld [vmem:[#allocation6 + $0x3b4] sm:$0xf]
    %v303 = vld [vmem:[#allocation6 + $0x3b8] sm:$0xf]
    %v304 = vld [vmem:[#allocation6 + $0x3bc] sm:$0xf]
    %v305 = vld [vmem:[#allocation6 + $0x3c0] sm:$0xf]
    %v306 = vld [vmem:[#allocation6 + $0x3c4] sm:$0xf]
    %v307 = vld [vmem:[#allocation6 + $0x3c8] sm:$0xf]
    %v308 = vld [vmem:[#allocation6 + $0x3cc] sm:$0xf]
    %v309 = vld [vmem:[#allocation6 + $0x3d0] sm:$0xf]
    %v310 = vld [vmem:[#allocation6 + $0x3d4] sm:$0xf]
    %v311 = vld [vmem:[#allocation6 + $0x3d8] sm:$0xf]
    %v312 = vld [vmem:[#allocation6 + $0x3dc] sm:$0xf]
    %v313 = vld [vmem:[#allocation6 + $0x3e0] sm:$0xf]
    %v314 = vld [vmem:[#allocation6 + $0x3e4] sm:$0xf]
    %v315 = vld [vmem:[#allocation6 + $0x3e8] sm:$0xf]
    %v316 = vld [vmem:[#allocation6 + $0x3ec] sm:$0xf]
    %v317 = vld [vmem:[#allocation6 + $0x3f0] sm:$0xf]
    %v318 = vld [vmem:[#allocation6 + $0x3f4] sm:$0xf]
    %v319 = vld [vmem:[#allocation6 + $0x3f8] sm:$0xf]
    %v320 = vld [vmem:[#allocation6 + $0x3fc] sm:$0xf]
    %v321 = vld [vmem:[#allocation6 + $0x400] sm:$0xf]
    %v322 = vld [vmem:[#allocation6 + $0x404] sm:$0xf]
    %v323 = vld [vmem:[#allocation6 + $0x408] sm:$0xf]
    %v324 = vld [vmem:[#allocation6 + $0x40c] sm:$0xf]
    %v325 = vld [vmem:[#allocation6 + $0x410] sm:$0xf]
    %v326 = vld [vmem:[#allocation6 + $0x414] sm:$0xf]
    %v327 = vld [vmem:[#allocation6 + $0x418] sm:$0xf]
    %v328 = vld [vmem:[#allocation6 + $0x41c] sm:$0xf]
    %v329 = vld [vmem:[#allocation6 + $0x420] sm:$0xf]
    %v330 = vld [vmem:[#allocation6 + $0x424] sm:$0xf]
    %v331 = vld [vmem:[#allocation6 + $0x428] sm:$0xf]
    %v332 = vld [vmem:[#allocation6 + $0x42c] sm:$0xf]
    %v333 = vld [vmem:[#allocation6 + $0x430] sm:$0xf]
    %v334 = vld [vmem:[#allocation6 + $0x434] sm:$0xf]
    %v335 = vld [vmem:[#allocation6 + $0x438] sm:$0xf]
    %v336 = vld [vmem:[#allocation6 + $0x43c] sm:$0xf]
    %v337 = vld [vmem:[#allocation6 + $0x440] sm:$0xf]
    %v338 = vld [vmem:[#allocation6 + $0x444] sm:$0xf]
    %v339 = vld [vmem:[#allocation6 + $0x448] sm:$0xf]
    %v340 = vld [vmem:[#allocation6 + $0x44c] sm:$0xf]
    %v341 = vld [vmem:[#allocation6 + $0x450] sm:$0xf]
    %v342 = vld [vmem:[#allocation6 + $0x454] sm:$0xf]
    %v343 = vld [vmem:[#allocation6 + $0x458] sm:$0xf]
    %v344 = vld [vmem:[#allocation6 + $0x45c] sm:$0xf]
    %v345 = vld [vmem:[#allocation6 + $0x460] sm:$0xf]
    %v346 = vld [vmem:[#allocation6 + $0x464] sm:$0xf]
    %v347 = vld [vmem:[#allocation6 + $0x468] sm:$0xf]
    %v348 = vld [vmem:[#allocation6 + $0x46c] sm:$0xf]
    %v349 = vld [vmem:[#allocation6 + $0x470] sm:$0xf]
    %v350 = vld [vmem:[#allocation6 + $0x474] sm:$0xf]
    %v351 = vld [vmem:[#allocation6 + $0x478] sm:$0xf]
    %v352 = vld [vmem:[#allocation6 + $0x47c] sm:$0xf]
    %v353 = vld [vmem:[#allocation6 + $0x480] sm:$0xf]
    %v354 = vld [vmem:[#allocation6 + $0x484] sm:$0xf]
    %v355 = vld [vmem:[#allocation6 + $0x488] sm:$0xf]
    %v356 = vld [vmem:[#allocation6 + $0x48c] sm:$0xf]
    %v357 = vld [vmem:[#allocation6 + $0x490] sm:$0xf]
    %v358 = vld [vmem:[#allocation6 + $0x494] sm:$0xf]
    %v359 = vld [vmem:[#allocation6 + $0x498] sm:$0xf]
    %v360 = vld [vmem:[#allocation6 + $0x49c] sm:$0xf]
    %v361 = vld [vmem:[#allocation6 + $0x4a0] sm:$0xf]
    %v362 = vld [vmem:[#allocation6 + $0x4a4] sm:$0xf]
    %v363 = vld [vmem:[#allocation6 + $0x4a8] sm:$0xf]
    %v364 = vld [vmem:[#allocation6 + $0x4ac] sm:$0xf]
    %v365 = vld [vmem:[#allocation6 + $0x4b0] sm:$0xf]
    %v366 = vld [vmem:[#allocation6 + $0x4b4] sm:$0xf]
    %v367 = vld [vmem:[#allocation6 + $0x4b8] sm:$0xf]
    %v368 = vld [vmem:[#allocation6 + $0x4bc] sm:$0xf]
    %v369 = vld [vmem:[#allocation6 + $0x4c0] sm:$0xf]
    %v370 = vld [vmem:[#allocation6 + $0x4c4] sm:$0xf]
    %v371 = vld [vmem:[#allocation6 + $0x4c8] sm:$0xf]
    %v372 = vld [vmem:[#allocation6 + $0x4cc] sm:$0xf]
    %v373 = vld [vmem:[#allocation6 + $0x4d0] sm:$0xf]
    %v374 = vld [vmem:[#allocation6 + $0x4d4] sm:$0xf]
    %v375 = vld [vmem:[#allocation6 + $0x4d8] sm:$0xf]
    %v376 = vld [vmem:[#allocation6 + $0x4dc] sm:$0xf]
    %v377 = vld [vmem:[#allocation6 + $0x4e0] sm:$0xf]
    %v378 = vld [vmem:[#allocation6 + $0x4e4] sm:$0xf]
    %v379 = vld [vmem:[#allocation6 + $0x4e8] sm:$0xf]
    %v380 = vld [vmem:[#allocation6 + $0x4ec] sm:$0xf]
    %v381 = vld [vmem:[#allocation6 + $0x4f0] sm:$0xf]
    %v382 = vld [vmem:[#allocation6 + $0x4f4] sm:$0xf]
    %v383 = vld [vmem:[#allocation6 + $0x4f8] sm:$0xf]
    %v384 = vld [vmem:[#allocation6 + $0x4fc] sm:$0xf]
    %v385 = vld [vmem:[#allocation6 + $0x500] sm:$0xf]
    %v386 = vld [vmem:[#allocation6 + $0x504] sm:$0xf]
    %v387 = vld [vmem:[#allocation6 + $0x508] sm:$0xf]
    %v388 = vld [vmem:[#allocation6 + $0x50c] sm:$0xf]
    %v389 = vld [vmem:[#allocation6 + $0x510] sm:$0xf]
    %v390 = vld [vmem:[#allocation6 + $0x514] sm:$0xf]
    %v391 = vld [vmem:[#allocation6 + $0x518] sm:$0xf]
    %v392 = vld [vmem:[#allocation6 + $0x51c] sm:$0xf]
    %v393 = vld [vmem:[#allocation6 + $0x520] sm:$0xf]
    %v394 = vld [vmem:[#allocation6 + $0x524] sm:$0xf]
    %v395 = vld [vmem:[#allocation6 + $0x528] sm:$0xf]
    %v396 = vld [vmem:[#allocation6 + $0x52c] sm:$0xf]
    %v397 = vld [vmem:[#allocation6 + $0x530] sm:$0xf]
    %v398 = vld [vmem:[#allocation6 + $0x534] sm:$0xf]
    %v399 = vld [vmem:[#allocation6 + $0x538] sm:$0xf]
    %v400 = vld [vmem:[#allocation6 + $0x53c] sm:$0xf]
    %v401 = vld [vmem:[#allocation6 + $0x540] sm:$0xf]
    %v402 = vld [vmem:[#allocation6 + $0x544] sm:$0xf]
    %v403 = vld [vmem:[#allocation6 + $0x548] sm:$0xf]
    %v404 = vld [vmem:[#allocation6 + $0x54c] sm:$0xf]
    %v405 = vld [vmem:[#allocation6 + $0x550] sm:$0xf]
    %v406 = vld [vmem:[#allocation6 + $0x554] sm:$0xf]
    %v407 = vld [vmem:[#allocation6 + $0x558] sm:$0xf]
    %v408 = vld [vmem:[#allocation6 + $0x55c] sm:$0xf]
    %v409 = vld [vmem:[#allocation6 + $0x560] sm:$0xf]
    %v410 = vld [vmem:[#allocation6 + $0x564] sm:$0xf]
    %v411 = vld [vmem:[#allocation6 + $0x568] sm:$0xf]
    %v412 = vld [vmem:[#allocation6 + $0x56c] sm:$0xf]
    %v413 = vld [vmem:[#allocation6 + $0x570] sm:$0xf]
    %v414 = vld [vmem:[#allocation6 + $0x574] sm:$0xf]
    %v415 = vld [vmem:[#allocation6 + $0x578] sm:$0xf]
    %v416 = vld [vmem:[#allocation6 + $0x57c] sm:$0xf]
    %v417 = vld [vmem:[#allocation6 + $0x580] sm:$0xf]
    %v418 = vld [vmem:[#allocation6 + $0x584] sm:$0xf]
    %v419 = vld [vmem:[#allocation6 + $0x588] sm:$0xf]
    %v420 = vld [vmem:[#allocation6 + $0x58c] sm:$0xf]
    %v421 = vld [vmem:[#allocation6 + $0x590] sm:$0xf]
    %v422 = vld [vmem:[#allocation6 + $0x594] sm:$0xf]
    %v423 = vld [vmem:[#allocation6 + $0x598] sm:$0xf]
    %v424 = vld [vmem:[#allocation6 + $0x59c] sm:$0xf]
    %v425 = vld [vmem:[#allocation6 + $0x5a0] sm:$0xf]
    %v426 = vld [vmem:[#allocation6 + $0x5a4] sm:$0xf]
    %v427 = vld [vmem:[#allocation6 + $0x5a8] sm:$0xf]
    %v428 = vld [vmem:[#allocation6 + $0x5ac] sm:$0xf]
    %v429 = vld [vmem:[#allocation6 + $0x5b0] sm:$0xf]
    %v430 = vld [vmem:[#allocation6 + $0x5b4] sm:$0xf]
    %v431 = vld [vmem:[#allocation6 + $0x5b8] sm:$0xf]
    %v432 = vld [vmem:[#allocation6 + $0x5bc] sm:$0xf]
    %v433 = vld [vmem:[#allocation6 + $0x5c0] sm:$0xf]
    %v434 = vld [vmem:[#allocation6 + $0x5c4] sm:$0xf]
    %v435 = vld [vmem:[#allocation6 + $0x5c8] sm:$0xf]
    %v436 = vld [vmem:[#allocation6 + $0x5cc] sm:$0xf]
    %v437 = vld [vmem:[#allocation6 + $0x5d0] sm:$0xf]
    %v438 = vld [vmem:[#allocation6 + $0x5d4] sm:$0xf]
    %v439 = vld [vmem:[#allocation6 + $0x5d8] sm:$0xf]
    %v440 = vld [vmem:[#allocation6 + $0x5dc] sm:$0xf]
    %v441 = vld [vmem:[#allocation6 + $0x5e0] sm:$0xf]
    %v442 = vld [vmem:[#allocation6 + $0x5e4] sm:$0xf]
    %v443 = vld [vmem:[#allocation6 + $0x5e8] sm:$0xf]
    %v444 = vld [vmem:[#allocation6 + $0x5ec] sm:$0xf]
    %v445 = vld [vmem:[#allocation6 + $0x5f0] sm:$0xf]
    %v446 = vld [vmem:[#allocation6 + $0x5f4] sm:$0xf]
    %v447 = vld [vmem:[#allocation6 + $0x5f8] sm:$0xf]
    %v448 = vld [vmem:[#allocation6 + $0x5fc] sm:$0xf]
    %v452 = vcombine.high %v62, %v62
    %v454 = vunpack.c.l.s4 1966171168
    %v455 = vunpack.c.0.s8 %v454
    %v456 = vlaneseq
    %v457 = vshrl.u32 %v456, 7
    %v458 = vsub.s32 %v455, %v457
    %v459 = vrot.slane %v62, %v458
    %v461 = vunpack.c.l.s4 1966171168
    %v462 = vunpack.c.0.s8 %v461
    %v463 = vlaneseq
    %v464 = vshrl.u32 %v463, 7
    %v465 = vsub.s32 %v462, %v464
    %v466 = vrot.slane %v452, %v465
    %v467 = vcombine.high %v459, %v459
    %v468 = vcombine.high %v466, %v466
    %v470 = vunpack.c.l.s4 1966171168
    %v471 = vunpack.c.0.s8 %v470
    %v472 = vlaneseq
    %v473 = vshrl.u32 %v472, 7
    %v474 = vsub.s32 %v471, %v473
    %v475 = vrot.slane %v459, %v474
    %v477 = vunpack.c.l.s4 1966171168
    %v478 = vunpack.c.0.s8 %v477
    %v479 = vlaneseq
    %v480 = vshrl.u32 %v479, 7
    %v481 = vsub.s32 %v478, %v480
    %v482 = vrot.slane %v466, %v481
    %v484 = vunpack.c.l.s4 1966171168
    %v485 = vunpack.c.0.s8 %v484
    %v486 = vlaneseq
    %v487 = vshrl.u32 %v486, 7
    %v488 = vsub.s32 %v485, %v487
    %v489 = vrot.slane %v467, %v488
    %v491 = vunpack.c.l.s4 1966171168
    %v492 = vunpack.c.0.s8 %v491
    %v493 = vlaneseq
    %v494 = vshrl.u32 %v493, 7
    %v495 = vsub.s32 %v492, %v494
    %v496 = vrot.slane %v468, %v495
    %v497 = vcombine.high %v475, %v475
    %v498 = vcombine.high %v482, %v482
    %v499 = vcombine.high %v489, %v489
    %v500 = vcombine.high %v496, %v496
    %v501 = vcombine.high %v63, %v63
    %v503 = vunpack.c.l.s4 1966171168
    %v504 = vunpack.c.0.s8 %v503
    %v505 = vlaneseq
    %v506 = vshrl.u32 %v505, 7
    %v507 = vsub.s32 %v504, %v506
    %v508 = vrot.slane %v63, %v507
    %v510 = vunpack.c.l.s4 1966171168
    %v511 = vunpack.c.0.s8 %v510
    %v512 = vlaneseq
    %v513 = vshrl.u32 %v512, 7
    %v514 = vsub.s32 %v511, %v513
    %v515 = vrot.slane %v501, %v514
    %v516 = vcombine.high %v508, %v508
    %v517 = vcombine.high %v515, %v515
    %v519 = vunpack.c.l.s4 1966171168
    %v520 = vunpack.c.0.s8 %v519
    %v521 = vlaneseq
    %v522 = vshrl.u32 %v521, 7
    %v523 = vsub.s32 %v520, %v522
    %v524 = vrot.slane %v508, %v523
    %v526 = vunpack.c.l.s4 1966171168
    %v527 = vunpack.c.0.s8 %v526
    %v528 = vlaneseq
    %v529 = vshrl.u32 %v528, 7
    %v530 = vsub.s32 %v527, %v529
    %v531 = vrot.slane %v515, %v530
    %v533 = vunpack.c.l.s4 1966171168
    %v534 = vunpack.c.0.s8 %v533
    %v535 = vlaneseq
    %v536 = vshrl.u32 %v535, 7
    %v537 = vsub.s32 %v534, %v536
    %v538 = vrot.slane %v516, %v537
    %v540 = vunpack.c.l.s4 1966171168
    %v541 = vunpack.c.0.s8 %v540
    %v542 = vlaneseq
    %v543 = vshrl.u32 %v542, 7
    %v544 = vsub.s32 %v541, %v543
    %v545 = vrot.slane %v517, %v544
    %v546 = vcombine.high %v524, %v524
    %v547 = vcombine.high %v531, %v531
    %v548 = vcombine.high %v538, %v538
    %v549 = vcombine.high %v545, %v545
    %v550 = vcombine.high %v64, %v64
    %v552 = vunpack.c.l.s4 1966171168
    %v553 = vunpack.c.0.s8 %v552
    %v554 = vlaneseq
    %v555 = vshrl.u32 %v554, 7
    %v556 = vsub.s32 %v553, %v555
    %v557 = vrot.slane %v64, %v556
    %v559 = vunpack.c.l.s4 1966171168
    %v560 = vunpack.c.0.s8 %v559
    %v561 = vlaneseq
    %v562 = vshrl.u32 %v561, 7
    %v563 = vsub.s32 %v560, %v562
    %v564 = vrot.slane %v550, %v563
    %v565 = vcombine.high %v557, %v557
    %v566 = vcombine.high %v564, %v564
    %v568 = vunpack.c.l.s4 1966171168
    %v569 = vunpack.c.0.s8 %v568
    %v570 = vlaneseq
    %v571 = vshrl.u32 %v570, 7
    %v572 = vsub.s32 %v569, %v571
    %v573 = vrot.slane %v557, %v572
    %v575 = vunpack.c.l.s4 1966171168
    %v576 = vunpack.c.0.s8 %v575
    %v577 = vlaneseq
    %v578 = vshrl.u32 %v577, 7
    %v579 = vsub.s32 %v576, %v578
    %v580 = vrot.slane %v564, %v579
    %v582 = vunpack.c.l.s4 1966171168
    %v583 = vunpack.c.0.s8 %v582
    %v584 = vlaneseq
    %v585 = vshrl.u32 %v584, 7
    %v586 = vsub.s32 %v583, %v585
    %v587 = vrot.slane %v565, %v586
    %v589 = vunpack.c.l.s4 1966171168
    %v590 = vunpack.c.0.s8 %v589
    %v591 = vlaneseq
    %v592 = vshrl.u32 %v591, 7
    %v593 = vsub.s32 %v590, %v592
    %v594 = vrot.slane %v566, %v593
    %v595 = vcombine.high %v573, %v573
    %v596 = vcombine.high %v580, %v580
    %v597 = vcombine.high %v587, %v587
    %v598 = vcombine.high %v594, %v594
    %v1007 = vunpack.c.l.b16 %v65
    %v1008 = vunpack.c.l.b16 %v66
    %v1009 = vunpack.c.l.b16 %v67
    %v1010 = vunpack.c.l.b16 %v68
    %v1011 = vunpack.c.l.b16 %v69
    %v1012 = vunpack.c.l.b16 %v70
    %v1013 = vunpack.c.l.b16 %v71
    %v1014 = vunpack.c.l.b16 %v72
    %v1015 = vunpack.c.l.b16 %v73
    %v1016 = vunpack.c.l.b16 %v74
    %v1017 = vunpack.c.l.b16 %v75
    %v1018 = vunpack.c.l.b16 %v76
    %v1019 = vunpack.c.l.b16 %v77
    %v1020 = vunpack.c.l.b16 %v78
    %v1021 = vunpack.c.l.b16 %v79
    %v1022 = vunpack.c.l.b16 %v80
    %v1023 = vunpack.c.l.b16 %v81
    %v1024 = vunpack.c.l.b16 %v82
    %v1025 = vunpack.c.l.b16 %v83
    %v1026 = vunpack.c.l.b16 %v84
    %v1027 = vunpack.c.l.b16 %v85
    %v1028 = vunpack.c.l.b16 %v86
    %v1029 = vunpack.c.l.b16 %v87
    %v1030 = vunpack.c.l.b16 %v88
    %v1031 = vunpack.c.l.b16 %v89
    %v1032 = vunpack.c.l.b16 %v90
    %v1033 = vunpack.c.l.b16 %v91
    %v1034 = vunpack.c.l.b16 %v92
    %v1035 = vunpack.c.l.b16 %v93
    %v1036 = vunpack.c.l.b16 %v94
    %v1037 = vunpack.c.l.b16 %v95
    %v1038 = vunpack.c.l.b16 %v96
    %v1039 = vunpack.c.l.b16 %v97
    %v1040 = vunpack.c.l.b16 %v98
    %v1041 = vunpack.c.l.b16 %v99
    %v1042 = vunpack.c.l.b16 %v100
    %v1043 = vunpack.c.l.b16 %v101
    %v1044 = vunpack.c.l.b16 %v102
    %v1045 = vunpack.c.l.b16 %v103
    %v1046 = vunpack.c.l.b16 %v104
    %v1047 = vunpack.c.l.b16 %v105
    %v1048 = vunpack.c.l.b16 %v106
    %v1049 = vunpack.c.l.b16 %v107
    %v1050 = vunpack.c.l.b16 %v108
    %v1051 = vunpack.c.l.b16 %v109
    %v1052 = vunpack.c.l.b16 %v110
    %v1053 = vunpack.c.l.b16 %v111
    %v1054 = vunpack.c.l.b16 %v112
    %v1055 = vunpack.c.l.b16 %v113
    %v1056 = vunpack.c.l.b16 %v114
    %v1057 = vunpack.c.l.b16 %v115
    %v1058 = vunpack.c.l.b16 %v116
    %v1059 = vunpack.c.l.b16 %v117
    %v1060 = vunpack.c.l.b16 %v118
    %v1061 = vunpack.c.l.b16 %v119
    %v1062 = vunpack.c.l.b16 %v120
    %v1063 = vunpack.c.l.b16 %v121
    %v1064 = vunpack.c.l.b16 %v122
    %v1065 = vunpack.c.l.b16 %v123
    %v1066 = vunpack.c.l.b16 %v124
    %v1067 = vunpack.c.l.b16 %v125
    %v1068 = vunpack.c.l.b16 %v126
    %v1069 = vunpack.c.l.b16 %v127
    %v1070 = vunpack.c.l.b16 %v128
    %v1071 = vunpack.c.l.b16 %v129
    %v1072 = vunpack.c.l.b16 %v130
    %v1073 = vunpack.c.l.b16 %v131
    %v1074 = vunpack.c.l.b16 %v132
    %v1075 = vunpack.c.l.b16 %v133
    %v1076 = vunpack.c.l.b16 %v134
    %v1077 = vunpack.c.l.b16 %v135
    %v1078 = vunpack.c.l.b16 %v136
    %v1079 = vunpack.c.l.b16 %v137
    %v1080 = vunpack.c.l.b16 %v138
    %v1081 = vunpack.c.l.b16 %v139
    %v1082 = vunpack.c.l.b16 %v140
    %v1083 = vunpack.c.l.b16 %v141
    %v1084 = vunpack.c.l.b16 %v142
    %v1085 = vunpack.c.l.b16 %v143
    %v1086 = vunpack.c.l.b16 %v144
    %v1087 = vunpack.c.l.b16 %v145
    %v1088 = vunpack.c.l.b16 %v146
    %v1089 = vunpack.c.l.b16 %v147
    %v1090 = vunpack.c.l.b16 %v148
    %v1091 = vunpack.c.l.b16 %v149
    %v1092 = vunpack.c.l.b16 %v150
    %v1093 = vunpack.c.l.b16 %v151
    %v1094 = vunpack.c.l.b16 %v152
    %v1095 = vunpack.c.l.b16 %v153
    %v1096 = vunpack.c.l.b16 %v154
    %v1097 = vunpack.c.l.b16 %v155
    %v1098 = vunpack.c.l.b16 %v156
    %v1099 = vunpack.c.l.b16 %v157
    %v1100 = vunpack.c.l.b16 %v158
    %v1101 = vunpack.c.l.b16 %v159
    %v1102 = vunpack.c.l.b16 %v160
    %v1103 = vunpack.c.l.b16 %v161
    %v1104 = vunpack.c.l.b16 %v162
    %v1105 = vunpack.c.l.b16 %v163
    %v1106 = vunpack.c.l.b16 %v164
    %v1107 = vunpack.c.l.b16 %v165
    %v1108 = vunpack.c.l.b16 %v166
    %v1109 = vunpack.c.l.b16 %v167
    %v1110 = vunpack.c.l.b16 %v168
    %v1111 = vunpack.c.l.b16 %v169
    %v1112 = vunpack.c.l.b16 %v170
    %v1113 = vunpack.c.l.b16 %v171
    %v1114 = vunpack.c.l.b16 %v172
    %v1115 = vunpack.c.l.b16 %v173
    %v1116 = vunpack.c.l.b16 %v174
    %v1117 = vunpack.c.l.b16 %v175
    %v1118 = vunpack.c.l.b16 %v176
    %v1119 = vunpack.c.l.b16 %v177
    %v1120 = vunpack.c.l.b16 %v178
    %v1121 = vunpack.c.l.b16 %v179
    %v1122 = vunpack.c.l.b16 %v180
    %v1123 = vunpack.c.l.b16 %v181
    %v1124 = vunpack.c.l.b16 %v182
    %v1125 = vunpack.c.l.b16 %v183
    %v1126 = vunpack.c.l.b16 %v184
    %v1127 = vunpack.c.l.b16 %v185
    %v1128 = vunpack.c.l.b16 %v186
    %v1129 = vunpack.c.l.b16 %v187
    %v1130 = vunpack.c.l.b16 %v188
    %v1131 = vunpack.c.l.b16 %v189
    %v1132 = vunpack.c.l.b16 %v190
    %v1133 = vunpack.c.l.b16 %v191
    %v1134 = vunpack.c.l.b16 %v192
    %v1135 = vunpack.c.l.b16 %v193
    %v1136 = vunpack.c.l.b16 %v194
    %v1137 = vunpack.c.l.b16 %v195
    %v1138 = vunpack.c.l.b16 %v196
    %v1139 = vunpack.c.l.b16 %v197
    %v1140 = vunpack.c.l.b16 %v198
    %v1141 = vunpack.c.l.b16 %v199
    %v1142 = vunpack.c.l.b16 %v200
    %v1143 = vunpack.c.l.b16 %v201
    %v1144 = vunpack.c.l.b16 %v202
    %v1145 = vunpack.c.l.b16 %v203
    %v1146 = vunpack.c.l.b16 %v204
    %v1147 = vunpack.c.l.b16 %v205
    %v1148 = vunpack.c.l.b16 %v206
    %v1149 = vunpack.c.l.b16 %v207
    %v1150 = vunpack.c.l.b16 %v208
    %v1151 = vunpack.c.l.b16 %v209
    %v1152 = vunpack.c.l.b16 %v210
    %v1153 = vunpack.c.l.b16 %v211
    %v1154 = vunpack.c.l.b16 %v212
    %v1155 = vunpack.c.l.b16 %v213
    %v1156 = vunpack.c.l.b16 %v214
    %v1157 = vunpack.c.l.b16 %v215
    %v1158 = vunpack.c.l.b16 %v216
    %v1159 = vunpack.c.l.b16 %v217
    %v1160 = vunpack.c.l.b16 %v218
    %v1161 = vunpack.c.l.b16 %v219
    %v1162 = vunpack.c.l.b16 %v220
    %v1163 = vunpack.c.l.b16 %v221
    %v1164 = vunpack.c.l.b16 %v222
    %v1165 = vunpack.c.l.b16 %v223
    %v1166 = vunpack.c.l.b16 %v224
    %v1167 = vunpack.c.l.b16 %v225
    %v1168 = vunpack.c.l.b16 %v226
    %v1169 = vunpack.c.l.b16 %v227
    %v1170 = vunpack.c.l.b16 %v228
    %v1171 = vunpack.c.l.b16 %v229
    %v1172 = vunpack.c.l.b16 %v230
    %v1173 = vunpack.c.l.b16 %v231
    %v1174 = vunpack.c.l.b16 %v232
    %v1175 = vunpack.c.l.b16 %v233
    %v1176 = vunpack.c.l.b16 %v234
    %v1177 = vunpack.c.l.b16 %v235
    %v1178 = vunpack.c.l.b16 %v236
    %v1179 = vunpack.c.l.b16 %v237
    %v1180 = vunpack.c.l.b16 %v238
    %v1181 = vunpack.c.l.b16 %v239
    %v1182 = vunpack.c.l.b16 %v240
    %v1183 = vunpack.c.l.b16 %v241
    %v1184 = vunpack.c.l.b16 %v242
    %v1185 = vunpack.c.l.b16 %v243
    %v1186 = vunpack.c.l.b16 %v244
    %v1187 = vunpack.c.l.b16 %v245
    %v1188 = vunpack.c.l.b16 %v246
    %v1189 = vunpack.c.l.b16 %v247
    %v1190 = vunpack.c.l.b16 %v248
    %v1191 = vunpack.c.l.b16 %v249
    %v1192 = vunpack.c.l.b16 %v250
    %v1193 = vunpack.c.l.b16 %v251
    %v1194 = vunpack.c.l.b16 %v252
    %v1195 = vunpack.c.l.b16 %v253
    %v1196 = vunpack.c.l.b16 %v254
    %v1197 = vunpack.c.l.b16 %v255
    %v1198 = vunpack.c.l.b16 %v256
    %v1199 = vunpack.c.l.b16 %v257
    %v1200 = vunpack.c.l.b16 %v258
    %v1201 = vunpack.c.l.b16 %v259
    %v1202 = vunpack.c.l.b16 %v260
    %v1203 = vunpack.c.l.b16 %v261
    %v1204 = vunpack.c.l.b16 %v262
    %v1205 = vunpack.c.l.b16 %v263
    %v1206 = vunpack.c.l.b16 %v264
    %v1207 = vunpack.c.l.b16 %v265
    %v1208 = vunpack.c.l.b16 %v266
    %v1209 = vunpack.c.l.b16 %v267
    %v1210 = vunpack.c.l.b16 %v268
    %v1211 = vunpack.c.l.b16 %v269
    %v1212 = vunpack.c.l.b16 %v270
    %v1213 = vunpack.c.l.b16 %v271
    %v1214 = vunpack.c.l.b16 %v272
    %v1215 = vunpack.c.l.b16 %v273
    %v1216 = vunpack.c.l.b16 %v274
    %v1217 = vunpack.c.l.b16 %v275
    %v1218 = vunpack.c.l.b16 %v276
    %v1219 = vunpack.c.l.b16 %v277
    %v1220 = vunpack.c.l.b16 %v278
    %v1221 = vunpack.c.l.b16 %v279
    %v1222 = vunpack.c.l.b16 %v280
    %v1223 = vunpack.c.l.b16 %v281
    %v1224 = vunpack.c.l.b16 %v282
    %v1225 = vunpack.c.l.b16 %v283
    %v1226 = vunpack.c.l.b16 %v284
    %v1227 = vunpack.c.l.b16 %v285
    %v1228 = vunpack.c.l.b16 %v286
    %v1229 = vunpack.c.l.b16 %v287
    %v1230 = vunpack.c.l.b16 %v288
    %v1231 = vunpack.c.l.b16 %v289
    %v1232 = vunpack.c.l.b16 %v290
    %v1233 = vunpack.c.l.b16 %v291
    %v1234 = vunpack.c.l.b16 %v292
    %v1235 = vunpack.c.l.b16 %v293
    %v1236 = vunpack.c.l.b16 %v294
    %v1237 = vunpack.c.l.b16 %v295
    %v1238 = vunpack.c.l.b16 %v296
    %v1239 = vunpack.c.l.b16 %v297
    %v1240 = vunpack.c.l.b16 %v298
    %v1241 = vunpack.c.l.b16 %v299
    %v1242 = vunpack.c.l.b16 %v300
    %v1243 = vunpack.c.l.b16 %v301
    %v1244 = vunpack.c.l.b16 %v302
    %v1245 = vunpack.c.l.b16 %v303
    %v1246 = vunpack.c.l.b16 %v304
    %v1247 = vunpack.c.l.b16 %v305
    %v1248 = vunpack.c.l.b16 %v306
    %v1249 = vunpack.c.l.b16 %v307
    %v1250 = vunpack.c.l.b16 %v308
    %v1251 = vunpack.c.l.b16 %v309
    %v1252 = vunpack.c.l.b16 %v310
    %v1253 = vunpack.c.l.b16 %v311
    %v1254 = vunpack.c.l.b16 %v312
    %v1255 = vunpack.c.l.b16 %v313
    %v1256 = vunpack.c.l.b16 %v314
    %v1257 = vunpack.c.l.b16 %v315
    %v1258 = vunpack.c.l.b16 %v316
    %v1259 = vunpack.c.l.b16 %v317
    %v1260 = vunpack.c.l.b16 %v318
    %v1261 = vunpack.c.l.b16 %v319
    %v1262 = vunpack.c.l.b16 %v320
    %v1263 = vunpack.c.l.b16 %v321
    %v1264 = vunpack.c.l.b16 %v322
    %v1265 = vunpack.c.l.b16 %v323
    %v1266 = vunpack.c.l.b16 %v324
    %v1267 = vunpack.c.l.b16 %v325
    %v1268 = vunpack.c.l.b16 %v326
    %v1269 = vunpack.c.l.b16 %v327
    %v1270 = vunpack.c.l.b16 %v328
    %v1271 = vunpack.c.l.b16 %v329
    %v1272 = vunpack.c.l.b16 %v330
    %v1273 = vunpack.c.l.b16 %v331
    %v1274 = vunpack.c.l.b16 %v332
    %v1275 = vunpack.c.l.b16 %v333
    %v1276 = vunpack.c.l.b16 %v334
    %v1277 = vunpack.c.l.b16 %v335
    %v1278 = vunpack.c.l.b16 %v336
    %v1279 = vunpack.c.l.b16 %v337
    %v1280 = vunpack.c.l.b16 %v338
    %v1281 = vunpack.c.l.b16 %v339
    %v1282 = vunpack.c.l.b16 %v340
    %v1283 = vunpack.c.l.b16 %v341
    %v1284 = vunpack.c.l.b16 %v342
    %v1285 = vunpack.c.l.b16 %v343
    %v1286 = vunpack.c.l.b16 %v344
    %v1287 = vunpack.c.l.b16 %v345
    %v1288 = vunpack.c.l.b16 %v346
    %v1289 = vunpack.c.l.b16 %v347
    %v1290 = vunpack.c.l.b16 %v348
    %v1291 = vunpack.c.l.b16 %v349
    %v1292 = vunpack.c.l.b16 %v350
    %v1293 = vunpack.c.l.b16 %v351
    %v1294 = vunpack.c.l.b16 %v352
    %v1295 = vunpack.c.l.b16 %v353
    %v1296 = vunpack.c.l.b16 %v354
    %v1297 = vunpack.c.l.b16 %v355
    %v1298 = vunpack.c.l.b16 %v356
    %v1299 = vunpack.c.l.b16 %v357
    %v1300 = vunpack.c.l.b16 %v358
    %v1301 = vunpack.c.l.b16 %v359
    %v1302 = vunpack.c.l.b16 %v360
    %v1303 = vunpack.c.l.b16 %v361
    %v1304 = vunpack.c.l.b16 %v362
    %v1305 = vunpack.c.l.b16 %v363
    %v1306 = vunpack.c.l.b16 %v364
    %v1307 = vunpack.c.l.b16 %v365
    %v1308 = vunpack.c.l.b16 %v366
    %v1309 = vunpack.c.l.b16 %v367
    %v1310 = vunpack.c.l.b16 %v368
    %v1311 = vunpack.c.l.b16 %v369
    %v1312 = vunpack.c.l.b16 %v370
    %v1313 = vunpack.c.l.b16 %v371
    %v1314 = vunpack.c.l.b16 %v372
    %v1315 = vunpack.c.l.b16 %v373
    %v1316 = vunpack.c.l.b16 %v374
    %v1317 = vunpack.c.l.b16 %v375
    %v1318 = vunpack.c.l.b16 %v376
    %v1319 = vunpack.c.l.b16 %v377
    %v1320 = vunpack.c.l.b16 %v378
    %v1321 = vunpack.c.l.b16 %v379
    %v1322 = vunpack.c.l.b16 %v380
    %v1323 = vunpack.c.l.b16 %v381
    %v1324 = vunpack.c.l.b16 %v382
    %v1325 = vunpack.c.l.b16 %v383
    %v1326 = vunpack.c.l.b16 %v384
    %v1327 = vunpack.c.l.b16 %v385
    %v1328 = vunpack.c.l.b16 %v386
    %v1329 = vunpack.c.l.b16 %v387
    %v1330 = vunpack.c.l.b16 %v388
    %v1331 = vunpack.c.l.b16 %v389
    %v1332 = vunpack.c.l.b16 %v390
    %v1333 = vunpack.c.l.b16 %v391
    %v1334 = vunpack.c.l.b16 %v392
    %v1335 = vunpack.c.l.b16 %v393
    %v1336 = vunpack.c.l.b16 %v394
    %v1337 = vunpack.c.l.b16 %v395
    %v1338 = vunpack.c.l.b16 %v396
    %v1339 = vunpack.c.l.b16 %v397
    %v1340 = vunpack.c.l.b16 %v398
    %v1341 = vunpack.c.l.b16 %v399
    %v1342 = vunpack.c.l.b16 %v400
    %v1343 = vunpack.c.l.b16 %v401
    %v1344 = vunpack.c.l.b16 %v402
    %v1345 = vunpack.c.l.b16 %v403
    %v1346 = vunpack.c.l.b16 %v404
    %v1347 = vunpack.c.l.b16 %v405
    %v1348 = vunpack.c.l.b16 %v406
    %v1349 = vunpack.c.l.b16 %v407
    %v1350 = vunpack.c.l.b16 %v408
    %v1351 = vunpack.c.l.b16 %v409
    %v1352 = vunpack.c.l.b16 %v410
    %v1353 = vunpack.c.l.b16 %v411
    %v1354 = vunpack.c.l.b16 %v412
    %v1355 = vunpack.c.l.b16 %v413
    %v1356 = vunpack.c.l.b16 %v414
    %v1357 = vunpack.c.l.b16 %v415
    %v1358 = vunpack.c.l.b16 %v416
    %v1359 = vunpack.c.l.b16 %v417
    %v1360 = vunpack.c.l.b16 %v418
    %v1361 = vunpack.c.l.b16 %v419
    %v1362 = vunpack.c.l.b16 %v420
    %v1363 = vunpack.c.l.b16 %v421
    %v1364 = vunpack.c.l.b16 %v422
    %v1365 = vunpack.c.l.b16 %v423
    %v1366 = vunpack.c.l.b16 %v424
    %v1367 = vunpack.c.l.b16 %v425
    %v1368 = vunpack.c.l.b16 %v426
    %v1369 = vunpack.c.l.b16 %v427
    %v1370 = vunpack.c.l.b16 %v428
    %v1371 = vunpack.c.l.b16 %v429
    %v1372 = vunpack.c.l.b16 %v430
    %v1373 = vunpack.c.l.b16 %v431
    %v1374 = vunpack.c.l.b16 %v432
    %v1375 = vunpack.c.l.b16 %v433
    %v1376 = vunpack.c.l.b16 %v434
    %v1377 = vunpack.c.l.b16 %v435
    %v1378 = vunpack.c.l.b16 %v436
    %v1379 = vunpack.c.l.b16 %v437
    %v1380 = vunpack.c.l.b16 %v438
    %v1381 = vunpack.c.l.b16 %v439
    %v1382 = vunpack.c.l.b16 %v440
    %v1383 = vunpack.c.l.b16 %v441
    %v1384 = vunpack.c.l.b16 %v442
    %v1385 = vunpack.c.l.b16 %v443
    %v1386 = vunpack.c.l.b16 %v444
    %v1387 = vunpack.c.l.b16 %v445
    %v1388 = vunpack.c.l.b16 %v446
    %v1389 = vunpack.c.l.b16 %v447
    %v1390 = vunpack.c.l.b16 %v448
    %v1391 = vpack.c.b16 %v1008, %v1007
    %v1392 = vpack.c.b16 %v1010, %v1009
    %v1393 = vpack.c.b16 %v1012, %v1011
    %v1394 = vpack.c.b16 %v1014, %v1013
    %v1395 = vpack.c.b16 %v1016, %v1015
    %v1396 = vpack.c.b16 %v1018, %v1017
    %v1397 = vpack.c.b16 %v1020, %v1019
    %v1398 = vpack.c.b16 %v1022, %v1021
    %v1399 = vpack.c.b16 %v1024, %v1023
    %v1400 = vpack.c.b16 %v1026, %v1025
    %v1401 = vpack.c.b16 %v1028, %v1027
    %v1402 = vpack.c.b16 %v1030, %v1029
    %v1403 = vpack.c.b16 %v1032, %v1031
    %v1404 = vpack.c.b16 %v1034, %v1033
    %v1405 = vpack.c.b16 %v1036, %v1035
    %v1406 = vpack.c.b16 %v1038, %v1037
    %v1407 = vpack.c.b16 %v1040, %v1039
    %v1408 = vpack.c.b16 %v1042, %v1041
    %v1409 = vpack.c.b16 %v1044, %v1043
    %v1410 = vpack.c.b16 %v1046, %v1045
    %v1411 = vpack.c.b16 %v1048, %v1047
    %v1412 = vpack.c.b16 %v1050, %v1049
    %v1413 = vpack.c.b16 %v1052, %v1051
    %v1414 = vpack.c.b16 %v1054, %v1053
    %v1415 = vpack.c.b16 %v1056, %v1055
    %v1416 = vpack.c.b16 %v1058, %v1057
    %v1417 = vpack.c.b16 %v1060, %v1059
    %v1418 = vpack.c.b16 %v1062, %v1061
    %v1419 = vpack.c.b16 %v1064, %v1063
    %v1420 = vpack.c.b16 %v1066, %v1065
    %v1421 = vpack.c.b16 %v1068, %v1067
    %v1422 = vpack.c.b16 %v1070, %v1069
    %v1423 = vpack.c.b16 %v1072, %v1071
    %v1424 = vpack.c.b16 %v1074, %v1073
    %v1425 = vpack.c.b16 %v1076, %v1075
    %v1426 = vpack.c.b16 %v1078, %v1077
    %v1427 = vpack.c.b16 %v1080, %v1079
    %v1428 = vpack.c.b16 %v1082, %v1081
    %v1429 = vpack.c.b16 %v1084, %v1083
    %v1430 = vpack.c.b16 %v1086, %v1085
    %v1431 = vpack.c.b16 %v1088, %v1087
    %v1432 = vpack.c.b16 %v1090, %v1089
    %v1433 = vpack.c.b16 %v1092, %v1091
    %v1434 = vpack.c.b16 %v1094, %v1093
    %v1435 = vpack.c.b16 %v1096, %v1095
    %v1436 = vpack.c.b16 %v1098, %v1097
    %v1437 = vpack.c.b16 %v1100, %v1099
    %v1438 = vpack.c.b16 %v1102, %v1101
    %v1439 = vpack.c.b16 %v1104, %v1103
    %v1440 = vpack.c.b16 %v1106, %v1105
    %v1441 = vpack.c.b16 %v1108, %v1107
    %v1442 = vpack.c.b16 %v1110, %v1109
    %v1443 = vpack.c.b16 %v1112, %v1111
    %v1444 = vpack.c.b16 %v1114, %v1113
    %v1445 = vpack.c.b16 %v1116, %v1115
    %v1446 = vpack.c.b16 %v1118, %v1117
    %v1447 = vpack.c.b16 %v1120, %v1119
    %v1448 = vpack.c.b16 %v1122, %v1121
    %v1449 = vpack.c.b16 %v1124, %v1123
    %v1450 = vpack.c.b16 %v1126, %v1125
    %v1451 = vpack.c.b16 %v1128, %v1127
    %v1452 = vpack.c.b16 %v1130, %v1129
    %v1453 = vpack.c.b16 %v1132, %v1131
    %v1454 = vpack.c.b16 %v1134, %v1133
    %v1455 = vpack.c.b16 %v1136, %v1135
    %v1456 = vpack.c.b16 %v1138, %v1137
    %v1457 = vpack.c.b16 %v1140, %v1139
    %v1458 = vpack.c.b16 %v1142, %v1141
    %v1459 = vpack.c.b16 %v1144, %v1143
    %v1460 = vpack.c.b16 %v1146, %v1145
    %v1461 = vpack.c.b16 %v1148, %v1147
    %v1462 = vpack.c.b16 %v1150, %v1149
    %v1463 = vpack.c.b16 %v1152, %v1151
    %v1464 = vpack.c.b16 %v1154, %v1153
    %v1465 = vpack.c.b16 %v1156, %v1155
    %v1466 = vpack.c.b16 %v1158, %v1157
    %v1467 = vpack.c.b16 %v1160, %v1159
    %v1468 = vpack.c.b16 %v1162, %v1161
    %v1469 = vpack.c.b16 %v1164, %v1163
    %v1470 = vpack.c.b16 %v1166, %v1165
    %v1471 = vpack.c.b16 %v1168, %v1167
    %v1472 = vpack.c.b16 %v1170, %v1169
    %v1473 = vpack.c.b16 %v1172, %v1171
    %v1474 = vpack.c.b16 %v1174, %v1173
    %v1475 = vpack.c.b16 %v1176, %v1175
    %v1476 = vpack.c.b16 %v1178, %v1177
    %v1477 = vpack.c.b16 %v1180, %v1179
    %v1478 = vpack.c.b16 %v1182, %v1181
    %v1479 = vpack.c.b16 %v1184, %v1183
    %v1480 = vpack.c.b16 %v1186, %v1185
    %v1481 = vpack.c.b16 %v1188, %v1187
    %v1482 = vpack.c.b16 %v1190, %v1189
    %v1483 = vpack.c.b16 %v1192, %v1191
    %v1484 = vpack.c.b16 %v1194, %v1193
    %v1485 = vpack.c.b16 %v1196, %v1195
    %v1486 = vpack.c.b16 %v1198, %v1197
    %v1487 = vpack.c.b16 %v1200, %v1199
    %v1488 = vpack.c.b16 %v1202, %v1201
    %v1489 = vpack.c.b16 %v1204, %v1203
    %v1490 = vpack.c.b16 %v1206, %v1205
    %v1491 = vpack.c.b16 %v1208, %v1207
    %v1492 = vpack.c.b16 %v1210, %v1209
    %v1493 = vpack.c.b16 %v1212, %v1211
    %v1494 = vpack.c.b16 %v1214, %v1213
    %v1495 = vpack.c.b16 %v1216, %v1215
    %v1496 = vpack.c.b16 %v1218, %v1217
    %v1497 = vpack.c.b16 %v1220, %v1219
    %v1498 = vpack.c.b16 %v1222, %v1221
    %v1499 = vpack.c.b16 %v1224, %v1223
    %v1500 = vpack.c.b16 %v1226, %v1225
    %v1501 = vpack.c.b16 %v1228, %v1227
    %v1502 = vpack.c.b16 %v1230, %v1229
    %v1503 = vpack.c.b16 %v1232, %v1231
    %v1504 = vpack.c.b16 %v1234, %v1233
    %v1505 = vpack.c.b16 %v1236, %v1235
    %v1506 = vpack.c.b16 %v1238, %v1237
    %v1507 = vpack.c.b16 %v1240, %v1239
    %v1508 = vpack.c.b16 %v1242, %v1241
    %v1509 = vpack.c.b16 %v1244, %v1243
    %v1510 = vpack.c.b16 %v1246, %v1245
    %v1511 = vpack.c.b16 %v1248, %v1247
    %v1512 = vpack.c.b16 %v1250, %v1249
    %v1513 = vpack.c.b16 %v1252, %v1251
    %v1514 = vpack.c.b16 %v1254, %v1253
    %v1515 = vpack.c.b16 %v1256, %v1255
    %v1516 = vpack.c.b16 %v1258, %v1257
    %v1517 = vpack.c.b16 %v1260, %v1259
    %v1518 = vpack.c.b16 %v1262, %v1261
    %v1519 = vpack.c.b16 %v1264, %v1263
    %v1520 = vpack.c.b16 %v1266, %v1265
    %v1521 = vpack.c.b16 %v1268, %v1267
    %v1522 = vpack.c.b16 %v1270, %v1269
    %v1523 = vpack.c.b16 %v1272, %v1271
    %v1524 = vpack.c.b16 %v1274, %v1273
    %v1525 = vpack.c.b16 %v1276, %v1275
    %v1526 = vpack.c.b16 %v1278, %v1277
    %v1527 = vpack.c.b16 %v1280, %v1279
    %v1528 = vpack.c.b16 %v1282, %v1281
    %v1529 = vpack.c.b16 %v1284, %v1283
    %v1530 = vpack.c.b16 %v1286, %v1285
    %v1531 = vpack.c.b16 %v1288, %v1287
    %v1532 = vpack.c.b16 %v1290, %v1289
    %v1533 = vpack.c.b16 %v1292, %v1291
    %v1534 = vpack.c.b16 %v1294, %v1293
    %v1535 = vpack.c.b16 %v1296, %v1295
    %v1536 = vpack.c.b16 %v1298, %v1297
    %v1537 = vpack.c.b16 %v1300, %v1299
    %v1538 = vpack.c.b16 %v1302, %v1301
    %v1539 = vpack.c.b16 %v1304, %v1303
    %v1540 = vpack.c.b16 %v1306, %v1305
    %v1541 = vpack.c.b16 %v1308, %v1307
    %v1542 = vpack.c.b16 %v1310, %v1309
    %v1543 = vpack.c.b16 %v1312, %v1311
    %v1544 = vpack.c.b16 %v1314, %v1313
    %v1545 = vpack.c.b16 %v1316, %v1315
    %v1546 = vpack.c.b16 %v1318, %v1317
    %v1547 = vpack.c.b16 %v1320, %v1319
    %v1548 = vpack.c.b16 %v1322, %v1321
    %v1549 = vpack.c.b16 %v1324, %v1323
    %v1550 = vpack.c.b16 %v1326, %v1325
    %v1551 = vpack.c.b16 %v1328, %v1327
    %v1552 = vpack.c.b16 %v1330, %v1329
    %v1553 = vpack.c.b16 %v1332, %v1331
    %v1554 = vpack.c.b16 %v1334, %v1333
    %v1555 = vpack.c.b16 %v1336, %v1335
    %v1556 = vpack.c.b16 %v1338, %v1337
    %v1557 = vpack.c.b16 %v1340, %v1339
    %v1558 = vpack.c.b16 %v1342, %v1341
    %v1559 = vpack.c.b16 %v1344, %v1343
    %v1560 = vpack.c.b16 %v1346, %v1345
    %v1561 = vpack.c.b16 %v1348, %v1347
    %v1562 = vpack.c.b16 %v1350, %v1349
    %v1563 = vpack.c.b16 %v1352, %v1351
    %v1564 = vpack.c.b16 %v1354, %v1353
    %v1565 = vpack.c.b16 %v1356, %v1355
    %v1566 = vpack.c.b16 %v1358, %v1357
    %v1567 = vpack.c.b16 %v1360, %v1359
    %v1568 = vpack.c.b16 %v1362, %v1361
    %v1569 = vpack.c.b16 %v1364, %v1363
    %v1570 = vpack.c.b16 %v1366, %v1365
    %v1571 = vpack.c.b16 %v1368, %v1367
    %v1572 = vpack.c.b16 %v1370, %v1369
    %v1573 = vpack.c.b16 %v1372, %v1371
    %v1574 = vpack.c.b16 %v1374, %v1373
    %v1575 = vpack.c.b16 %v1376, %v1375
    %v1576 = vpack.c.b16 %v1378, %v1377
    %v1577 = vpack.c.b16 %v1380, %v1379
    %v1578 = vpack.c.b16 %v1382, %v1381
    %v1579 = vpack.c.b16 %v1384, %v1383
    %v1580 = vpack.c.b16 %v1386, %v1385
    %v1581 = vpack.c.b16 %v1388, %v1387
    %v1582 = vpack.c.b16 %v1390, %v1389
    %1775 = vmatprep.subr.bf16.mxu0 0
    %1776 = vmatpush1.bf16.msra.mxu0 %v1391
    %1777 = vmatprep.subr.bf16.mxu0 0
    %1778 = vmatpush1.bf16.msra.mxu0 %v1392
    %1779 = vmatprep.subr.bf16.mxu0 0
    %1780 = vmatpush1.bf16.msra.mxu0 %v1393
    %1781 = vmatprep.subr.bf16.mxu0 0
    %1782 = vmatpush1.bf16.msra.mxu0 %v1394
    %1783 = vmatprep.subr.bf16.mxu0 0
    %1784 = vmatpush1.bf16.msra.mxu0 %v1395
    %1785 = vmatprep.subr.bf16.mxu0 0
    %1786 = vmatpush1.bf16.msra.mxu0 %v1396
    %1787 = vmatprep.subr.bf16.mxu0 0
    %1788 = vmatpush1.bf16.msra.mxu0 %v1397
    %1789 = vmatprep.subr.bf16.mxu0 0
    %1790 = vmatpush1.bf16.msra.mxu0 %v1398
    %1791 = vmatprep.subr.bf16.mxu0 0
    %1792 = vmatpush1.bf16.msra.mxu0 %v1399
    %1793 = vmatprep.subr.bf16.mxu0 0
    %1794 = vmatpush1.bf16.msra.mxu0 %v1400
    %1795 = vmatprep.subr.bf16.mxu0 0
    %1796 = vmatpush1.bf16.msra.mxu0 %v1401
    %1797 = vmatprep.subr.bf16.mxu0 0
    %1798 = vmatpush1.bf16.msra.mxu0 %v1402
    %1799 = vmatprep.subr.bf16.mxu0 0
    %1800 = vmatpush1.bf16.msra.mxu0 %v1403
    %1801 = vmatprep.subr.bf16.mxu0 0
    %1802 = vmatpush1.bf16.msra.mxu0 %v1404
    %1803 = vmatprep.subr.bf16.mxu0 0
    %1804 = vmatpush1.bf16.msra.mxu0 %v1405
    %1805 = vmatprep.subr.bf16.mxu0 0
    %1806 = vmatpush1.bf16.msra.mxu0 %v1406
    %1807 = vmatprep.mubr.bf16.mxu0 %v489
    %1808 = vmatmul.mubr.bf16.gmra.mrb[0].mxu0 %v475
    %v1809 = vpop.f32.mrb[0].mxu0
    %v1810 = vadd.f32 0.0, %v1809
    %v1811 = vpop.f32.mrb[0].mxu0
    %v1812 = vpop.f32.mrb[0].mxu0
    %v1813 = vpop.f32.mrb[0].mxu0
    %1814 = vdwg.mxu0
    %1815 = vmatprep.subr.bf16.mxu0 0
    %1816 = vmatpush1.bf16.msra.mxu0 %v1407
    %1817 = vmatprep.subr.bf16.mxu0 0
    %1818 = vmatpush1.bf16.msra.mxu0 %v1408
    %1819 = vmatprep.subr.bf16.mxu0 0
    %1820 = vmatpush1.bf16.msra.mxu0 %v1409
    %1821 = vmatprep.subr.bf16.mxu0 0
    %1822 = vmatpush1.bf16.msra.mxu0 %v1410
    %1823 = vmatprep.subr.bf16.mxu0 0
    %1824 = vmatpush1.bf16.msra.mxu0 %v1411
    %1825 = vmatprep.subr.bf16.mxu0 0
    %1826 = vmatpush1.bf16.msra.mxu0 %v1412
    %1827 = vmatprep.subr.bf16.mxu0 0
    %1828 = vmatpush1.bf16.msra.mxu0 %v1413
    %1829 = vmatprep.subr.bf16.mxu0 0
    %1830 = vmatpush1.bf16.msra.mxu0 %v1414
    %1831 = vmatprep.subr.bf16.mxu0 0
    %1832 = vmatpush1.bf16.msra.mxu0 %v1415
    %1833 = vmatprep.subr.bf16.mxu0 0
    %1834 = vmatpush1.bf16.msra.mxu0 %v1416
    %1835 = vmatprep.subr.bf16.mxu0 0
    %1836 = vmatpush1.bf16.msra.mxu0 %v1417
    %1837 = vmatprep.subr.bf16.mxu0 0
    %1838 = vmatpush1.bf16.msra.mxu0 %v1418
    %1839 = vmatprep.subr.bf16.mxu0 0
    %1840 = vmatpush1.bf16.msra.mxu0 %v1419
    %1841 = vmatprep.subr.bf16.mxu0 0
    %1842 = vmatpush1.bf16.msra.mxu0 %v1420
    %1843 = vmatprep.subr.bf16.mxu0 0
    %1844 = vmatpush1.bf16.msra.mxu0 %v1421
    %1845 = vmatprep.subr.bf16.mxu0 0
    %1846 = vmatpush1.bf16.msra.mxu0 %v1422
    %1847 = vmatprep.mubr.bf16.mxu0 %v499
    %1848 = vmatmul.mubr.bf16.gmra.mrb[0].mxu0 %v497
    %v1849 = vpop.f32.mrb[0].mxu0
    %v1850 = vadd.f32 %v1810, %v1849
    %v1851 = vpop.f32.mrb[0].mxu0
    %v1852 = vpop.f32.mrb[0].mxu0
    %v1853 = vpop.f32.mrb[0].mxu0
    %1854 = vdwg.mxu0
    %1855 = vmatprep.subr.bf16.mxu0 0
    %1856 = vmatpush1.bf16.msra.mxu0 %v1423
    %1857 = vmatprep.subr.bf16.mxu0 0
    %1858 = vmatpush1.bf16.msra.mxu0 %v1424
    %1859 = vmatprep.subr.bf16.mxu0 0
    %1860 = vmatpush1.bf16.msra.mxu0 %v1425
    %1861 = vmatprep.subr.bf16.mxu0 0
    %1862 = vmatpush1.bf16.msra.mxu0 %v1426
    %1863 = vmatprep.subr.bf16.mxu0 0
    %1864 = vmatpush1.bf16.msra.mxu0 %v1427
    %1865 = vmatprep.subr.bf16.mxu0 0
    %1866 = vmatpush1.bf16.msra.mxu0 %v1428
    %1867 = vmatprep.subr.bf16.mxu0 0
    %1868 = vmatpush1.bf16.msra.mxu0 %v1429
    %1869 = vmatprep.subr.bf16.mxu0 0
    %1870 = vmatpush1.bf16.msra.mxu0 %v1430
    %1871 = vmatprep.subr.bf16.mxu0 0
    %1872 = vmatpush1.bf16.msra.mxu0 %v1431
    %1873 = vmatprep.subr.bf16.mxu0 0
    %1874 = vmatpush1.bf16.msra.mxu0 %v1432
    %1875 = vmatprep.subr.bf16.mxu0 0
    %1876 = vmatpush1.bf16.msra.mxu0 %v1433
    %1877 = vmatprep.subr.bf16.mxu0 0
    %1878 = vmatpush1.bf16.msra.mxu0 %v1434
    %1879 = vmatprep.subr.bf16.mxu0 0
    %1880 = vmatpush1.bf16.msra.mxu0 %v1435
    %1881 = vmatprep.subr.bf16.mxu0 0
    %1882 = vmatpush1.bf16.msra.mxu0 %v1436
    %1883 = vmatprep.subr.bf16.mxu0 0
    %1884 = vmatpush1.bf16.msra.mxu0 %v1437
    %1885 = vmatprep.subr.bf16.mxu0 0
    %1886 = vmatpush1.bf16.msra.mxu0 %v1438
    %1887 = vmatprep.mubr.bf16.mxu0 %v496
    %1888 = vmatmul.mubr.bf16.gmra.mrb[0].mxu0 %v482
    %v1889 = vpop.f32.mrb[0].mxu0
    %v1890 = vadd.f32 %v1850, %v1889
    %v1891 = vpop.f32.mrb[0].mxu0
    %v1892 = vpop.f32.mrb[0].mxu0
    %v1893 = vpop.f32.mrb[0].mxu0
    %1894 = vdwg.mxu0
    %1895 = vmatprep.subr.bf16.mxu0 0
    %1896 = vmatpush1.bf16.msra.mxu0 %v1439
    %1897 = vmatprep.subr.bf16.mxu0 0
    %1898 = vmatpush1.bf16.msra.mxu0 %v1440
    %1899 = vmatprep.subr.bf16.mxu0 0
    %1900 = vmatpush1.bf16.msra.mxu0 %v1441
    %1901 = vmatprep.subr.bf16.mxu0 0
    %1902 = vmatpush1.bf16.msra.mxu0 %v1442
    %1903 = vmatprep.subr.bf16.mxu0 0
    %1904 = vmatpush1.bf16.msra.mxu0 %v1443
    %1905 = vmatprep.subr.bf16.mxu0 0
    %1906 = vmatpush1.bf16.msra.mxu0 %v1444
    %1907 = vmatprep.subr.bf16.mxu0 0
    %1908 = vmatpush1.bf16.msra.mxu0 %v1445
    %1909 = vmatprep.subr.bf16.mxu0 0
    %1910 = vmatpush1.bf16.msra.mxu0 %v1446
    %1911 = vmatprep.subr.bf16.mxu0 0
    %1912 = vmatpush1.bf16.msra.mxu0 %v1447
    %1913 = vmatprep.subr.bf16.mxu0 0
    %1914 = vmatpush1.bf16.msra.mxu0 %v1448
    %1915 = vmatprep.subr.bf16.mxu0 0
    %1916 = vmatpush1.bf16.msra.mxu0 %v1449
    %1917 = vmatprep.subr.bf16.mxu0 0
    %1918 = vmatpush1.bf16.msra.mxu0 %v1450
    %1919 = vmatprep.subr.bf16.mxu0 0
    %1920 = vmatpush1.bf16.msra.mxu0 %v1451
    %1921 = vmatprep.subr.bf16.mxu0 0
    %1922 = vmatpush1.bf16.msra.mxu0 %v1452
    %1923 = vmatprep.subr.bf16.mxu0 0
    %1924 = vmatpush1.bf16.msra.mxu0 %v1453
    %1925 = vmatprep.subr.bf16.mxu0 0
    %1926 = vmatpush1.bf16.msra.mxu0 %v1454
    %1927 = vmatprep.mubr.bf16.mxu0 %v500
    %1928 = vmatmul.mubr.bf16.gmra.mrb[0].mxu0 %v498
    %v1929 = vpop.f32.mrb[0].mxu0
    %v1930 = vadd.f32 %v1890, %v1929
    %v1931 = vpop.f32.mrb[0].mxu0
    %v1932 = vpop.f32.mrb[0].mxu0
    %v1933 = vpop.f32.mrb[0].mxu0
    %1934 = vdwg.mxu0
    %1935 = vmatprep.subr.bf16.mxu0 0
    %1936 = vmatpush1.bf16.msra.mxu0 %v1455
    %1937 = vmatprep.subr.bf16.mxu0 0
    %1938 = vmatpush1.bf16.msra.mxu0 %v1456
    %1939 = vmatprep.subr.bf16.mxu0 0
    %1940 = vmatpush1.bf16.msra.mxu0 %v1457
    %1941 = vmatprep.subr.bf16.mxu0 0
    %1942 = vmatpush1.bf16.msra.mxu0 %v1458
    %1943 = vmatprep.subr.bf16.mxu0 0
    %1944 = vmatpush1.bf16.msra.mxu0 %v1459
    %1945 = vmatprep.subr.bf16.mxu0 0
    %1946 = vmatpush1.bf16.msra.mxu0 %v1460
    %1947 = vmatprep.subr.bf16.mxu0 0
    %1948 = vmatpush1.bf16.msra.mxu0 %v1461
    %1949 = vmatprep.subr.bf16.mxu0 0
    %1950 = vmatpush1.bf16.msra.mxu0 %v1462
    %1951 = vmatprep.subr.bf16.mxu0 0
    %1952 = vmatpush1.bf16.msra.mxu0 %v1463
    %1953 = vmatprep.subr.bf16.mxu0 0
    %1954 = vmatpush1.bf16.msra.mxu0 %v1464
    %1955 = vmatprep.subr.bf16.mxu0 0
    %1956 = vmatpush1.bf16.msra.mxu0 %v1465
    %1957 = vmatprep.subr.bf16.mxu0 0
    %1958 = vmatpush1.bf16.msra.mxu0 %v1466
    %1959 = vmatprep.subr.bf16.mxu0 0
    %1960 = vmatpush1.bf16.msra.mxu0 %v1467
    %1961 = vmatprep.subr.bf16.mxu0 0
    %1962 = vmatpush1.bf16.msra.mxu0 %v1468
    %1963 = vmatprep.subr.bf16.mxu0 0
    %1964 = vmatpush1.bf16.msra.mxu0 %v1469
    %1965 = vmatprep.subr.bf16.mxu0 0
    %1966 = vmatpush1.bf16.msra.mxu0 %v1470
    %1967 = vmatprep.mubr.bf16.mxu0 %v538
    %1968 = vmatmul.mubr.bf16.gmra.mrb[0].mxu0 %v524
    %v1969 = vpop.f32.mrb[0].mxu0
    %v1970 = vadd.f32 %v1930, %v1969
    %v1971 = vpop.f32.mrb[0].mxu0
    %v1972 = vpop.f32.mrb[0].mxu0
    %v1973 = vpop.f32.mrb[0].mxu0
    %1974 = vdwg.mxu0
    %1975 = vmatprep.subr.bf16.mxu0 0
    %1976 = vmatpush1.bf16.msra.mxu0 %v1471
    %1977 = vmatprep.subr.bf16.mxu0 0
    %1978 = vmatpush1.bf16.msra.mxu0 %v1472
    %1979 = vmatprep.subr.bf16.mxu0 0
    %1980 = vmatpush1.bf16.msra.mxu0 %v1473
    %1981 = vmatprep.subr.bf16.mxu0 0
    %1982 = vmatpush1.bf16.msra.mxu0 %v1474
    %1983 = vmatprep.subr.bf16.mxu0 0
    %1984 = vmatpush1.bf16.msra.mxu0 %v1475
    %1985 = vmatprep.subr.bf16.mxu0 0
    %1986 = vmatpush1.bf16.msra.mxu0 %v1476
    %1987 = vmatprep.subr.bf16.mxu0 0
    %1988 = vmatpush1.bf16.msra.mxu0 %v1477
    %1989 = vmatprep.subr.bf16.mxu0 0
    %1990 = vmatpush1.bf16.msra.mxu0 %v1478
    %1991 = vmatprep.subr.bf16.mxu0 0
    %1992 = vmatpush1.bf16.msra.mxu0 %v1479
    %1993 = vmatprep.subr.bf16.mxu0 0
    %1994 = vmatpush1.bf16.msra.mxu0 %v1480
    %1995 = vmatprep.subr.bf16.mxu0 0
    %1996 = vmatpush1.bf16.msra.mxu0 %v1481
    %1997 = vmatprep.subr.bf16.mxu0 0
    %1998 = vmatpush1.bf16.msra.mxu0 %v1482
    %1999 = vmatprep.subr.bf16.mxu0 0
    %2000 = vmatpush1.bf16.msra.mxu0 %v1483
    %2001 = vmatprep.subr.bf16.mxu0 0
    %2002 = vmatpush1.bf16.msra.mxu0 %v1484
    %2003 = vmatprep.subr.bf16.mxu0 0
    %2004 = vmatpush1.bf16.msra.mxu0 %v1485
    %2005 = vmatprep.subr.bf16.mxu0 0
    %2006 = vmatpush1.bf16.msra.mxu0 %v1486
    %2007 = vmatprep.mubr.bf16.mxu0 %v548
    %2008 = vmatmul.mubr.bf16.gmra.mrb[0].mxu0 %v546
    %v2009 = vpop.f32.mrb[0].mxu0
    %v2010 = vadd.f32 %v1970, %v2009
    %v2011 = vpop.f32.mrb[0].mxu0
    %v2012 = vpop.f32.mrb[0].mxu0
    %v2013 = vpop.f32.mrb[0].mxu0
    %2014 = vdwg.mxu0
    %2015 = vmatprep.subr.bf16.mxu0 0
    %2016 = vmatpush1.bf16.msra.mxu0 %v1487
    %2017 = vmatprep.subr.bf16.mxu0 0
    %2018 = vmatpush1.bf16.msra.mxu0 %v1488
    %2019 = vmatprep.subr.bf16.mxu0 0
    %2020 = vmatpush1.bf16.msra.mxu0 %v1489
    %2021 = vmatprep.subr.bf16.mxu0 0
    %2022 = vmatpush1.bf16.msra.mxu0 %v1490
    %2023 = vmatprep.subr.bf16.mxu0 0
    %2024 = vmatpush1.bf16.msra.mxu0 %v1491
    %2025 = vmatprep.subr.bf16.mxu0 0
    %2026 = vmatpush1.bf16.msra.mxu0 %v1492
    %2027 = vmatprep.subr.bf16.mxu0 0
    %2028 = vmatpush1.bf16.msra.mxu0 %v1493
    %2029 = vmatprep.subr.bf16.mxu0 0
    %2030 = vmatpush1.bf16.msra.mxu0 %v1494
    %2031 = vmatprep.subr.bf16.mxu0 0
    %2032 = vmatpush1.bf16.msra.mxu0 %v1495
    %2033 = vmatprep.subr.bf16.mxu0 0
    %2034 = vmatpush1.bf16.msra.mxu0 %v1496
    %2035 = vmatprep.subr.bf16.mxu0 0
    %2036 = vmatpush1.bf16.msra.mxu0 %v1497
    %2037 = vmatprep.subr.bf16.mxu0 0
    %2038 = vmatpush1.bf16.msra.mxu0 %v1498
    %2039 = vmatprep.subr.bf16.mxu0 0
    %2040 = vmatpush1.bf16.msra.mxu0 %v1499
    %2041 = vmatprep.subr.bf16.mxu0 0
    %2042 = vmatpush1.bf16.msra.mxu0 %v1500
    %2043 = vmatprep.subr.bf16.mxu0 0
    %2044 = vmatpush1.bf16.msra.mxu0 %v1501
    %2045 = vmatprep.subr.bf16.mxu0 0
    %2046 = vmatpush1.bf16.msra.mxu0 %v1502
    %2047 = vmatprep.mubr.bf16.mxu0 %v545
    %2048 = vmatmul.mubr.bf16.gmra.mrb[0].mxu0 %v531
    %v2049 = vpop.f32.mrb[0].mxu0
    %v2050 = vadd.f32 %v2010, %v2049
    %v2051 = vpop.f32.mrb[0].mxu0
    %v2052 = vpop.f32.mrb[0].mxu0
    %v2053 = vpop.f32.mrb[0].mxu0
    %2054 = vdwg.mxu0
    %2055 = vmatprep.subr.bf16.mxu0 0
    %2056 = vmatpush1.bf16.msra.mxu0 %v1503
    %2057 = vmatprep.subr.bf16.mxu0 0
    %2058 = vmatpush1.bf16.msra.mxu0 %v1504
    %2059 = vmatprep.subr.bf16.mxu0 0
    %2060 = vmatpush1.bf16.msra.mxu0 %v1505
    %2061 = vmatprep.subr.bf16.mxu0 0
    %2062 = vmatpush1.bf16.msra.mxu0 %v1506
    %2063 = vmatprep.subr.bf16.mxu0 0
    %2064 = vmatpush1.bf16.msra.mxu0 %v1507
    %2065 = vmatprep.subr.bf16.mxu0 0
    %2066 = vmatpush1.bf16.msra.mxu0 %v1508
    %2067 = vmatprep.subr.bf16.mxu0 0
    %2068 = vmatpush1.bf16.msra.mxu0 %v1509
    %2069 = vmatprep.subr.bf16.mxu0 0
    %2070 = vmatpush1.bf16.msra.mxu0 %v1510
    %2071 = vmatprep.subr.bf16.mxu0 0
    %2072 = vmatpush1.bf16.msra.mxu0 %v1511
    %2073 = vmatprep.subr.bf16.mxu0 0
    %2074 = vmatpush1.bf16.msra.mxu0 %v1512
    %2075 = vmatprep.subr.bf16.mxu0 0
    %2076 = vmatpush1.bf16.msra.mxu0 %v1513
    %2077 = vmatprep.subr.bf16.mxu0 0
    %2078 = vmatpush1.bf16.msra.mxu0 %v1514
    %2079 = vmatprep.subr.bf16.mxu0 0
    %2080 = vmatpush1.bf16.msra.mxu0 %v1515
    %2081 = vmatprep.subr.bf16.mxu0 0
    %2082 = vmatpush1.bf16.msra.mxu0 %v1516
    %2083 = vmatprep.subr.bf16.mxu0 0
    %2084 = vmatpush1.bf16.msra.mxu0 %v1517
    %2085 = vmatprep.subr.bf16.mxu0 0
    %2086 = vmatpush1.bf16.msra.mxu0 %v1518
    %2087 = vmatprep.mubr.bf16.mxu0 %v549
    %2088 = vmatmul.mubr.bf16.gmra.mrb[0].mxu0 %v547
    %v2089 = vpop.f32.mrb[0].mxu0
    %v2090 = vadd.f32 %v2050, %v2089
    %v2091 = vpop.f32.mrb[0].mxu0
    %v2092 = vpop.f32.mrb[0].mxu0
    %v2093 = vpop.f32.mrb[0].mxu0
    %2094 = vdwg.mxu0
    %2095 = vmatprep.subr.bf16.mxu0 0
    %2096 = vmatpush1.bf16.msra.mxu0 %v1519
    %2097 = vmatprep.subr.bf16.mxu0 0
    %2098 = vmatpush1.bf16.msra.mxu0 %v1520
    %2099 = vmatprep.subr.bf16.mxu0 0
    %2100 = vmatpush1.bf16.msra.mxu0 %v1521
    %2101 = vmatprep.subr.bf16.mxu0 0
    %2102 = vmatpush1.bf16.msra.mxu0 %v1522
    %2103 = vmatprep.subr.bf16.mxu0 0
    %2104 = vmatpush1.bf16.msra.mxu0 %v1523
    %2105 = vmatprep.subr.bf16.mxu0 0
    %2106 = vmatpush1.bf16.msra.mxu0 %v1524
    %2107 = vmatprep.subr.bf16.mxu0 0
    %2108 = vmatpush1.bf16.msra.mxu0 %v1525
    %2109 = vmatprep.subr.bf16.mxu0 0
    %2110 = vmatpush1.bf16.msra.mxu0 %v1526
    %2111 = vmatprep.subr.bf16.mxu0 0
    %2112 = vmatpush1.bf16.msra.mxu0 %v1527
    %2113 = vmatprep.subr.bf16.mxu0 0
    %2114 = vmatpush1.bf16.msra.mxu0 %v1528
    %2115 = vmatprep.subr.bf16.mxu0 0
    %2116 = vmatpush1.bf16.msra.mxu0 %v1529
    %2117 = vmatprep.subr.bf16.mxu0 0
    %2118 = vmatpush1.bf16.msra.mxu0 %v1530
    %2119 = vmatprep.subr.bf16.mxu0 0
    %2120 = vmatpush1.bf16.msra.mxu0 %v1531
    %2121 = vmatprep.subr.bf16.mxu0 0
    %2122 = vmatpush1.bf16.msra.mxu0 %v1532
    %2123 = vmatprep.subr.bf16.mxu0 0
    %2124 = vmatpush1.bf16.msra.mxu0 %v1533
    %2125 = vmatprep.subr.bf16.mxu0 0
    %2126 = vmatpush1.bf16.msra.mxu0 %v1534
    %2127 = vmatprep.mubr.bf16.mxu0 %v587
    %2128 = vmatmul.mubr.bf16.gmra.mrb[0].mxu0 %v573
    %v2129 = vpop.f32.mrb[0].mxu0
    %v2130 = vadd.f32 %v2090, %v2129
    %v2131 = vpop.f32.mrb[0].mxu0
    %v2132 = vpop.f32.mrb[0].mxu0
    %v2133 = vpop.f32.mrb[0].mxu0
    %2134 = vdwg.mxu0
    %2135 = vmatprep.subr.bf16.mxu0 0
    %2136 = vmatpush1.bf16.msra.mxu0 %v1535
    %2137 = vmatprep.subr.bf16.mxu0 0
    %2138 = vmatpush1.bf16.msra.mxu0 %v1536
    %2139 = vmatprep.subr.bf16.mxu0 0
    %2140 = vmatpush1.bf16.msra.mxu0 %v1537
    %2141 = vmatprep.subr.bf16.mxu0 0
    %2142 = vmatpush1.bf16.msra.mxu0 %v1538
    %2143 = vmatprep.subr.bf16.mxu0 0
    %2144 = vmatpush1.bf16.msra.mxu0 %v1539
    %2145 = vmatprep.subr.bf16.mxu0 0
    %2146 = vmatpush1.bf16.msra.mxu0 %v1540
    %2147 = vmatprep.subr.bf16.mxu0 0
    %2148 = vmatpush1.bf16.msra.mxu0 %v1541
    %2149 = vmatprep.subr.bf16.mxu0 0
    %2150 = vmatpush1.bf16.msra.mxu0 %v1542
    %2151 = vmatprep.subr.bf16.mxu0 0
    %2152 = vmatpush1.bf16.msra.mxu0 %v1543
    %2153 = vmatprep.subr.bf16.mxu0 0
    %2154 = vmatpush1.bf16.msra.mxu0 %v1544
    %2155 = vmatprep.subr.bf16.mxu0 0
    %2156 = vmatpush1.bf16.msra.mxu0 %v1545
    %2157 = vmatprep.subr.bf16.mxu0 0
    %2158 = vmatpush1.bf16.msra.mxu0 %v1546
    %2159 = vmatprep.subr.bf16.mxu0 0
    %2160 = vmatpush1.bf16.msra.mxu0 %v1547
    %2161 = vmatprep.subr.bf16.mxu0 0
    %2162 = vmatpush1.bf16.msra.mxu0 %v1548
    %2163 = vmatprep.subr.bf16.mxu0 0
    %2164 = vmatpush1.bf16.msra.mxu0 %v1549
    %2165 = vmatprep.subr.bf16.mxu0 0
    %2166 = vmatpush1.bf16.msra.mxu0 %v1550
    %2167 = vmatprep.mubr.bf16.mxu0 %v597
    %2168 = vmatmul.mubr.bf16.gmra.mrb[0].mxu0 %v595
    %v2169 = vpop.f32.mrb[0].mxu0
    %v2170 = vadd.f32 %v2130, %v2169
    %v2171 = vpop.f32.mrb[0].mxu0
    %v2172 = vpop.f32.mrb[0].mxu0
    %v2173 = vpop.f32.mrb[0].mxu0
    %2174 = vdwg.mxu0
    %2175 = vmatprep.subr.bf16.mxu0 0
    %2176 = vmatpush1.bf16.msra.mxu0 %v1551
    %2177 = vmatprep.subr.bf16.mxu0 0
    %2178 = vmatpush1.bf16.msra.mxu0 %v1552
    %2179 = vmatprep.subr.bf16.mxu0 0
    %2180 = vmatpush1.bf16.msra.mxu0 %v1553
    %2181 = vmatprep.subr.bf16.mxu0 0
    %2182 = vmatpush1.bf16.msra.mxu0 %v1554
    %2183 = vmatprep.subr.bf16.mxu0 0
    %2184 = vmatpush1.bf16.msra.mxu0 %v1555
    %2185 = vmatprep.subr.bf16.mxu0 0
    %2186 = vmatpush1.bf16.msra.mxu0 %v1556
    %2187 = vmatprep.subr.bf16.mxu0 0
    %2188 = vmatpush1.bf16.msra.mxu0 %v1557
    %2189 = vmatprep.subr.bf16.mxu0 0
    %2190 = vmatpush1.bf16.msra.mxu0 %v1558
    %2191 = vmatprep.subr.bf16.mxu0 0
    %2192 = vmatpush1.bf16.msra.mxu0 %v1559
    %2193 = vmatprep.subr.bf16.mxu0 0
    %2194 = vmatpush1.bf16.msra.mxu0 %v1560
    %2195 = vmatprep.subr.bf16.mxu0 0
    %2196 = vmatpush1.bf16.msra.mxu0 %v1561
    %2197 = vmatprep.subr.bf16.mxu0 0
    %2198 = vmatpush1.bf16.msra.mxu0 %v1562
    %2199 = vmatprep.subr.bf16.mxu0 0
    %2200 = vmatpush1.bf16.msra.mxu0 %v1563
    %2201 = vmatprep.subr.bf16.mxu0 0
    %2202 = vmatpush1.bf16.msra.mxu0 %v1564
    %2203 = vmatprep.subr.bf16.mxu0 0
    %2204 = vmatpush1.bf16.msra.mxu0 %v1565
    %2205 = vmatprep.subr.bf16.mxu0 0
    %2206 = vmatpush1.bf16.msra.mxu0 %v1566
    %2207 = vmatprep.mubr.bf16.mxu0 %v594
    %2208 = vmatmul.mubr.bf16.gmra.mrb[0].mxu0 %v580
    %v2209 = vpop.f32.mrb[0].mxu0
    %v2210 = vadd.f32 %v2170, %v2209
    %v2211 = vpop.f32.mrb[0].mxu0
    %v2212 = vpop.f32.mrb[0].mxu0
    %v2213 = vpop.f32.mrb[0].mxu0
    %2214 = vdwg.mxu0
    %2215 = vmatprep.subr.bf16.mxu0 0
    %2216 = vmatpush1.bf16.msra.mxu0 %v1567
    %2217 = vmatprep.subr.bf16.mxu0 0
    %2218 = vmatpush1.bf16.msra.mxu0 %v1568
    %2219 = vmatprep.subr.bf16.mxu0 0
    %2220 = vmatpush1.bf16.msra.mxu0 %v1569
    %2221 = vmatprep.subr.bf16.mxu0 0
    %2222 = vmatpush1.bf16.msra.mxu0 %v1570
    %2223 = vmatprep.subr.bf16.mxu0 0
    %2224 = vmatpush1.bf16.msra.mxu0 %v1571
    %2225 = vmatprep.subr.bf16.mxu0 0
    %2226 = vmatpush1.bf16.msra.mxu0 %v1572
    %2227 = vmatprep.subr.bf16.mxu0 0
    %2228 = vmatpush1.bf16.msra.mxu0 %v1573
    %2229 = vmatprep.subr.bf16.mxu0 0
    %2230 = vmatpush1.bf16.msra.mxu0 %v1574
    %2231 = vmatprep.subr.bf16.mxu0 0
    %2232 = vmatpush1.bf16.msra.mxu0 %v1575
    %2233 = vmatprep.subr.bf16.mxu0 0
    %2234 = vmatpush1.bf16.msra.mxu0 %v1576
    %2235 = vmatprep.subr.bf16.mxu0 0
    %2236 = vmatpush1.bf16.msra.mxu0 %v1577
    %2237 = vmatprep.subr.bf16.mxu0 0
    %2238 = vmatpush1.bf16.msra.mxu0 %v1578
    %2239 = vmatprep.subr.bf16.mxu0 0
    %2240 = vmatpush1.bf16.msra.mxu0 %v1579
    %2241 = vmatprep.subr.bf16.mxu0 0
    %2242 = vmatpush1.bf16.msra.mxu0 %v1580
    %2243 = vmatprep.subr.bf16.mxu0 0
    %2244 = vmatpush1.bf16.msra.mxu0 %v1581
    %2245 = vmatprep.subr.bf16.mxu0 0
    %2246 = vmatpush1.bf16.msra.mxu0 %v1582
    %2247 = vmatprep.mubr.bf16.mxu0 %v598
    %2248 = vmatmul.mubr.bf16.gmra.mrb[0].mxu0 %v596
    %v2249 = vpop.f32.mrb[0].mxu0
    %v2250 = vadd.f32 %v2210, %v2249
    %v2251 = vpop.f32.mrb[0].mxu0
    %v2252 = vpop.f32.mrb[0].mxu0
    %v2253 = vpop.f32.mrb[0].mxu0
    %2254 = vdwg.mxu0
    %v2255 = vld [vmem:[%s2] sm:$0x3]
    %v2256 = vlaneseq
    %v2257 = vand.u32 %v2256, 127
    %v2258 = vlaneseq
    %v2259 = vshrl.u32 %v2258, 7
    %v2260 = vsub.s32 0, %v2259
    %v2261 = vrot.slane %v2255, %v2260
    %2263 = vbcast.lane.b32.xlu0 %v2261, 256
    %v2264 = vpop.permute.xlu0 %2263
    %v2265 = vlaneseq
    %v2266 = vshrl.u32 %v2265, 7
    %v2267 = vsub.s32 1, %v2266
    %v2268 = vrot.slane %v2255, %v2267
    %2270 = vbcast.lane.b32.xlu0 %v2268, 256
    %v2271 = vpop.permute.xlu0 %2270
    %vm2272 = vcmp.eq.s32.totalorder %v2264, %v2257
    %vm2273 = vcmp.eq.s32.totalorder %v2271, %v2257
    %v2274 = vsel %vm2272, 1, 0
    %v2275 = vsel %vm2273, 1, 0
    %v2276 = vcvt.s32.f32 %v2274
    %v2277 = vcvt.s32.f32 %v2275
    %v2278 = vrot.slane %v2276, 4
    %v2279 = vadd.f32 %v2276, %v2278
    %v2280 = vrot.slane %v2279, 2
    %v2281 = vadd.f32 %v2279, %v2280
    %v2282 = vrot.slane %v2281, 1
    %v2283 = vadd.f32 %v2281, %v2282
    %v2284 = vrot.slane %v2277, 4
    %v2285 = vadd.f32 %v2277, %v2284
    %v2286 = vrot.slane %v2285, 2
    %v2287 = vadd.f32 %v2285, %v2286
    %v2288 = vrot.slane %v2287, 1
    %v2289 = vadd.f32 %v2287, %v2288
    %v2290 = vpack.c.bf16 %v2283, %v2283
    %v2291 = vpack.c.bf16 %v2289, %v2289
    %v2292 = vld [vmem:[#allocation8] sm:$0xf]
    %v2293 = vld [vmem:[#allocation8 + $0x4] sm:$0xf]
    %v2294 = vld [vmem:[#allocation8 + $0x8] sm:$0xf]
    %v2295 = vld [vmem:[#allocation8 + $0xc] sm:$0xf]
    %v2296 = vld [vmem:[#allocation8 + $0x10] sm:$0xf]
    %v2297 = vld [vmem:[#allocation8 + $0x14] sm:$0xf]
    %v2298 = vld [vmem:[#allocation8 + $0x18] sm:$0xf]
    %v2299 = vld [vmem:[#allocation8 + $0x1c] sm:$0xf]
    %v2300 = vld [vmem:[#allocation8 + $0x20] sm:$0xf]
    %v2301 = vld [vmem:[#allocation8 + $0x24] sm:$0xf]
    %v2302 = vld [vmem:[#allocation8 + $0x28] sm:$0xf]
    %v2303 = vld [vmem:[#allocation8 + $0x2c] sm:$0xf]
    %v2304 = vld [vmem:[#allocation8 + $0x30] sm:$0xf]
    %v2305 = vld [vmem:[#allocation8 + $0x34] sm:$0xf]
    %v2306 = vld [vmem:[#allocation8 + $0x38] sm:$0xf]
    %v2307 = vld [vmem:[#allocation8 + $0x3c] sm:$0xf]
    %v2310 = vunpack.c.l.b16 %v2290
    %v2311 = vunpack.c.l.b16 %v2291
    %vm2312 = vcmask 1041409
    %v2313 = vsel %vm2312, %v2311, %v2310
    %v2314 = vpack.c.b16 %v2313, %v2313
    %v2332 = vunpack.c.l.b16 %v2292
    %v2333 = vunpack.c.l.b16 %v2293
    %v2334 = vunpack.c.l.b16 %v2294
    %v2335 = vunpack.c.l.b16 %v2295
    %v2336 = vunpack.c.l.b16 %v2296
    %v2337 = vunpack.c.l.b16 %v2297
    %v2338 = vunpack.c.l.b16 %v2298
    %v2339 = vunpack.c.l.b16 %v2299
    %v2340 = vunpack.c.l.b16 %v2300
    %v2341 = vunpack.c.l.b16 %v2301
    %v2342 = vunpack.c.l.b16 %v2302
    %v2343 = vunpack.c.l.b16 %v2303
    %v2344 = vunpack.c.l.b16 %v2304
    %v2345 = vunpack.c.l.b16 %v2305
    %v2346 = vunpack.c.l.b16 %v2306
    %v2347 = vunpack.c.l.b16 %v2307
    %v2348 = vpack.c.b16 %v2333, %v2332
    %v2349 = vpack.c.b16 %v2335, %v2334
    %v2350 = vpack.c.b16 %v2337, %v2336
    %v2351 = vpack.c.b16 %v2339, %v2338
    %v2352 = vpack.c.b16 %v2341, %v2340
    %v2353 = vpack.c.b16 %v2343, %v2342
    %v2354 = vpack.c.b16 %v2345, %v2344
    %v2355 = vpack.c.b16 %v2347, %v2346
    %2364 = vmatprep.subr.bf16.mxu0 0
    %2365 = vmatpush1.bf16.msra.mxu0 %v2348
    %2366 = vmatprep.subr.bf16.mxu0 0
    %2367 = vmatpush1.bf16.msra.mxu0 %v2349
    %2368 = vmatprep.subr.bf16.mxu0 0
    %2369 = vmatpush1.bf16.msra.mxu0 %v2350
    %2370 = vmatprep.subr.bf16.mxu0 0
    %2371 = vmatpush1.bf16.msra.mxu0 %v2351
    %2372 = vmatprep.subr.bf16.mxu0 0
    %2373 = vmatpush1.bf16.msra.mxu0 %v2352
    %2374 = vmatprep.subr.bf16.mxu0 0
    %2375 = vmatpush1.bf16.msra.mxu0 %v2353
    %2376 = vmatprep.subr.bf16.mxu0 0
    %2377 = vmatpush1.bf16.msra.mxu0 %v2354
    %2378 = vmatprep.subr.bf16.mxu0 0
    %2379 = vmatpush1.bf16.msra.mxu0 %v2355
    %2380 = vmatprep.subr.bf16.mxu0 0
    %2381 = vmatpush1.bf16.msra.mxu0 0
    %2382 = vmatprep.subr.bf16.mxu0 0
    %2383 = vmatpush1.bf16.msra.mxu0 0
    %2384 = vmatprep.subr.bf16.mxu0 0
    %2385 = vmatpush1.bf16.msra.mxu0 0
    %2386 = vmatprep.subr.bf16.mxu0 0
    %2387 = vmatpush1.bf16.msra.mxu0 0
    %2388 = vmatprep.subr.bf16.mxu0 0
    %2389 = vmatpush1.bf16.msra.mxu0 0
    %2390 = vmatprep.subr.bf16.mxu0 0
    %2391 = vmatpush1.bf16.msra.mxu0 0
    %2392 = vmatprep.subr.bf16.mxu0 0
    %2393 = vmatpush1.bf16.msra.mxu0 0
    %2394 = vmatprep.subr.bf16.mxu0 0
    %2395 = vmatpush1.bf16.msra.mxu0 0
    %2396 = vmatprep.mubr.bf16.mxu0 0
    %2397 = vmatmul.mubr.bf16.gmra.mrb[0].mxu0 %v2314
    %v2398 = vpop.f32.mrb[0].mxu0
    %v2399 = vadd.f32 0.0, %v2398
    %v2400 = vpop.f32.mrb[0].mxu0
    %v2401 = vpop.f32.mrb[0].mxu0
    %v2402 = vpop.f32.mrb[0].mxu0
    %2403 = vdwg.mxu0
    %v2404 = vmul.f32 %v2399, 0.125
    %s2405 = sld [smem:[#allocation2]]
    %s2406 = smul.f32 %s2405, 0.01
    %v2407 = vmul.f32 %v2250, %v2250
    %vm2408 = vcmask 1041408
    %v2409 = vsel %vm2408, %v2407, 0.0
    %2410 = vadd.xlane.f32.xlu0 %v2409
    %v2411 = vpop.xlane.xlu0 %2410
    %v2412 = vrsqrt.pop %v2411
    %v2413 = vstv %s2406
    %v2414 = vmul.f32 %v2412, %v2413
    %v2415 = vmul.f32 %v2250, %v2414
    %v2416 = vmul.f32 %v2404, %v2404
    %v2417 = vsel %vm2408, %v2416, 0.0
    %2418 = vadd.xlane.f32.xlu0 %v2417
    %v2419 = vpop.xlane.xlu0 %2418
    %v2420 = vrsqrt.pop %v2419
    %v2421 = vmul.f32 %v2404, %v2420
    %v2424 = vunpack.c.l.s4 1966171168
    %v2425 = vunpack.c.0.s8 %v2424
    %v2426 = vlaneseq
    %v2427 = vshrl.u32 %v2426, 7
    %v2428 = vsub.s32 %v2425, %v2427
    %v2429 = vrot.slane %v2415, %v2428
    %v2430 = vcombine.high %v2429, %v2429
    %v2432 = vunpack.c.l.s4 1966171168
    %v2433 = vunpack.c.0.s8 %v2432
    %v2434 = vlaneseq
    %v2435 = vshrl.u32 %v2434, 7
    %v2436 = vsub.s32 %v2433, %v2435
    %v2437 = vrot.slane %v2429, %v2436
    %v2439 = vunpack.c.l.s4 1966171168
    %v2440 = vunpack.c.0.s8 %v2439
    %v2441 = vlaneseq
    %v2442 = vshrl.u32 %v2441, 7
    %v2443 = vsub.s32 %v2440, %v2442
    %v2444 = vrot.slane %v2430, %v2443
    %v2445 = vlaneseq
    %v2446 = vshrl.u32 %v2445, 7
    %v2447 = vsub.s32 0, %v2446
    %v2448 = vrot.slane %v2437, %v2447
    %v2449 = vlaneseq
    %v2450 = vshrl.u32 %v2449, 7
    %v2451 = vsub.s32 0, %v2450
    %v2452 = vrot.slane %v2444, %v2451
    %v2455 = vmul.f32 %v2448, %v2421
    %v2456 = vmul.f32 %v2452, %v2421
    %v2457 = vsel %vm2408, %v2455, 0.0
    %2458 = vadd.xlane.f32.xlu0 %v2457
    %v2459 = vpop.xlane.xlu0 %2458
    %v2460 = vsel %vm2408, %v2456, 0.0
    %2461 = vadd.xlane.f32.xlu0 %v2460
    %v2462 = vpop.xlane.xlu0 %2461
    %v2463 = vsub.f32 1.0, %v2459
    %v2464 = vsub.f32 1.0, %v2462
    %v2467 = vlaneseq
    %v2468 = vshrl.u32 %v2467, 7
    %v2469 = vsub.s32 %v2257, %v2468
    %v2470 = vrot.slane %v2463, %v2469
    %v2471 = vlaneseq
    %v2472 = vshrl.u32 %v2471, 7
    %v2473 = vsub.s32 %v2257, %v2472
    %v2474 = vrot.slane %v2464, %v2473
    %v2475 = vsel %vm2312, %v2474, %v2470
    %vm2477 = vcmask 9216
    %2478 = vst.msk [vmem:[#allocation9] sm:$0x3] %vm2477, %v2475
    // Predicated region
    $region34: #{tpu_custom_call.1} parent=1 // pred_check
      _
    $region35: #{tpu_custom_call.1} parent=1 // pred_check_branch
      %2480 = sbr.rel (0) target = $region37
    $region36: #{tpu_custom_call.1} parent=1 // pred_region
      %s2482 = ssub.s32 32, 32
      %2483 = vsyncadd [#allocation5], %s2482
      %s2485 = sshll.u32 [#allocation9], 4
      %s2486 = int_to_ptr.vmem [resolvable:$true] %s2485
      %2488 = dma.vmem_to_hbm [thread:$0]  %s2486, 32, %s5, [#allocation5]
    $region37: #{tpu_custom_call.1} parent=1 // pred_fallthru
      _
    // Predicated region
    $region38: #{tpu_custom_call.1} parent=1 // pred_check
      _
    $region39: #{tpu_custom_call.1} parent=1 // pred_check_branch
      %2490 = sbr.rel (0) target = $region41
    $region40: #{tpu_custom_call.1} parent=1 // pred_region
      %2491 = dma.done [#allocation5], 32
    $region41: #{tpu_custom_call.1} parent=1 // pred_fallthru
      _
    %2492 = vsyncpa [#allocation4], 1
    %2493 = vsyncpa [#allocation7], 1
    %2494 = vsyncpa [#allocation5], 1

</llo_original>
